<compile_context>
chip_gen: v5e
topology: v5e:2x2
jax: 0.10.0
libtpu: 0.0.40
codegen_flags: <defaults>
</compile_context>

<pallas_src>
import numpy as np
import jax
import jax.numpy as jnp
from jax.experimental import pallas as pl
from jax.experimental.pallas import tpu as pltpu


def _cdiv(a, b):
    return -(-a // b)


def _round_up(x, m):
    return _cdiv(x, m) * m


def _convnet_encoder_kernel(x_ref,
                            w1_ref, b1_ref, w2_ref, b2_ref,
                            w3_ref, b3_ref, w4_ref, b4_ref,
                            out_ref, xp_ref):
    """Fused 4 x (Conv1d k=3 pad=1 + ReLU) + per-layer time-max for one batch tile."""
    T, Bt, Dp = x_ref.shape
    Cp = b1_ref.shape[-1]
    cdt = xp_ref.dtype                        # MXU operand dtype (bf16 or f32)

    # Persistent zero-padded activation buffer: rows 0 and T+1 are the Conv1d
    # zero padding (padding=1); zero them once per tile across all lanes.
    zero_row = jnp.zeros(xp_ref.shape[1:], cdt)
    xp_ref[0] = zero_row
    xp_ref[T + 1] = zero_row

    # Layer-1 input -> interior rows, lanes [0:Dp).
    xp_ref[pl.ds(1, T), :, pl.ds(0, Dp)] = x_ref[...].astype(cdt)

    def conv_relu(w_ref, b_ref, cin):
        # Conv1d(k=3, stride=1, pad=1) as ONE stacked-tap MXU matmul:
        #   xs[t] = [x[t-1], x[t], x[t+1]] along lanes; W stacked tap-major.
        x0 = xp_ref[pl.ds(0, T), :, pl.ds(0, cin)]    # x[t-1]
        x1 = xp_ref[pl.ds(1, T), :, pl.ds(0, cin)]    # x[t]
        x2 = xp_ref[pl.ds(2, T), :, pl.ds(0, cin)]    # x[t+1]
        xs = jnp.concatenate([x0, x1, x2], axis=-1)   # (T, Bt, 3*cin), lane concat
        y = jnp.dot(xs.reshape(T * Bt, 3 * cin), w_ref[...],
                    preferred_element_type=jnp.float32)   # f32 accumulate
        y = y.reshape(T, Bt, Cp) + b_ref[...]              # bias in f32
        return jnp.maximum(y, 0.0)                          # ReLU in f32

    h = conv_relu(w1_ref, b1_ref, Dp)
    u1 = jnp.max(h, axis=0)                                # (Bt, Cp), f32
    xp_ref[pl.ds(1, T), :, pl.ds(0, Cp)] = h.astype(cdt)

    h = conv_relu(w2_ref, b2_ref, Cp)
    u2 = jnp.max(h, axis=0)
    xp_ref[pl.ds(1, T), :, pl.ds(0, Cp)] = h.astype(cdt)

    h = conv_relu(w3_ref, b3_ref, Cp)
    u3 = jnp.max(h, axis=0)
    xp_ref[pl.ds(1, T), :, pl.ds(0, Cp)] = h.astype(cdt)

    h = conv_relu(w4_ref, b4_ref, Cp)
    u4 = jnp.max(h, axis=0)

    # Single lane-dense writeback: (Bt, 4*Cp).
    out_ref[...] = jnp.concatenate([u1, u2, u3, u4],
                                   axis=-1).astype(out_ref.dtype)


def convnet_encoder(sent, sent_len, params, *, batch_tile=None,
                    compute_dtype=jnp.bfloat16):
    """ConvNetEncoder forward.

    sent: (T, B, D) float32; sent_len: (B,) (unused by the original forward).
    Returns emb: (B, 8 * enc_lstm_dim) float32.
    """
    del sent_len  # API parity; ConvNetEncoder.forward never reads it
    T, B, D = sent.shape
    C = params['w1'].shape[0]                     # 2 * enc_lstm_dim
    itemsize = jnp.dtype(compute_dtype).itemsize
    sub = 8 * (4 // itemsize)                     # sublane multiple: 8 f32 / 16 bf16

    # Lane padding: pad layer-1 Cin (=D) and Cout up to multiples of 128 so all
    # vregs / bias / ReLU / max / writebacks are lane-dense (zero padding,
    # sliced off after the kernel).
    Dp = _round_up(D, 128)
    Cp = _round_up(C, 128)
    Cw = max(Dp, Cp)                              # shared activation-scratch width

    # ---- batch tile: sublane-aligned, v7x-VMEM-safe, >= 2 tiles when possible.
    if batch_tile is None:
        bt = _round_up(max(_cdiv(512, T), sub), sub)          # fill MXU M rows
        per_row = ((T + 2) * Cw * itemsize                    # padded scratch
                   + T * (3 * Cw * itemsize + 2 * Cp * 4))    # stacked operand + f32 y/h
        budget = 12 << 20                                      # sized for v7x 64 MiB VMEM
        while bt > sub and bt * per_row > budget:
            bt -= sub
        b_pad = _round_up(B, sub)
        if b_pad >= 2 * sub:          # allow ("parallel",) to split across v7x TCs
            bt = min(bt, _round_up(_cdiv(b_pad, 2), sub))
        bt = min(bt, b_pad)
    else:
        bt = batch_tile
        if bt % sub != 0:
            raise ValueError(f"batch_tile must be a multiple of {sub}")
    Bp = _round_up(B, bt)

    # ---- operand prep (cheap wrapper-side XLA ops)
    x = jnp.pad(sent.astype(compute_dtype),
                ((0, 0), (0, Bp - B), (0, Dp - D)))            # (T, Bp, Dp)

    def prep_w(w, cin, cin_p):        # (Cout, cin, 3) -> (3*cin_p, Cp), tap-stacked
        wt = jnp.transpose(w, (2, 1, 0))                       # (3, cin, Cout)
        wt = jnp.pad(wt, ((0, 0), (0, cin_p - cin), (0, Cp - C)))
        return wt.reshape(3 * cin_p, Cp).astype(compute_dtype)

    def prep_b(b):                    # (Cout,) -> (1, Cp) f32
        return jnp.pad(b, (0, Cp - C)).reshape(1, Cp).astype(jnp.float32)

    args = (x,
            prep_w(params['w1'], D, Dp), prep_b(params['b1']),
            prep_w(params['w2'], C, Cp), prep_b(params['b2']),
            prep_w(params['w3'], C, Cp), prep_b(params['b3']),
            prep_w(params['w4'], C, Cp), prep_b(params['b4']))

    # Grid-invariant weights/biases: whole-array blocks, single-buffered (their
    # block index never changes, so double buffering would only burn VMEM).
    def const_spec(a):
        return pl.BlockSpec(a.shape, lambda i: (0,) * a.ndim,
                            pipeline_mode=pl.Buffered(1))

    in_specs = [pl.BlockSpec((T, bt, Dp), lambda i: (0, i, 0))]
    in_specs += [const_spec(a) for a in args[1:]]

    # Explicit VMEM budget: weights + persistent scratch + temporaries +
    # pipelined I/O blocks, with 2x headroom (capped at v7x physical 64 MiB).
    w_bytes = sum(int(np.prod(a.shape)) * a.dtype.itemsize for a in args[1:])
    scratch_bytes = (T + 2) * bt * Cw * itemsize
    tmp_bytes = T * bt * (3 * Cw * itemsize + 2 * Cp * 4)
    io_bytes = 2 * T * bt * Dp * itemsize + 2 * bt * 4 * Cp * 4
    vmem_limit = int(min(64 << 20,
                         max(32 << 20,
                             2 * (w_bytes + scratch_bytes + tmp_bytes + io_bytes))))

    # TODO(synk): for production 2H (>= 2048) the stacked weights no longer fit
    # VMEM; that regime should keep activations resident and stream Cout-blocked
    # weights from HBM (memory_space=pl.ANY + pltpu.emit_pipeline), with the
    # weight-resident threshold halved on v7x (64 MiB VMEM vs 128 MiB).
    out = pl.pallas_call(
        _convnet_encoder_kernel,
        out_shape=jax.ShapeDtypeStruct((Bp, 4 * Cp), jnp.float32),
        grid=(Bp // bt,),
        in_specs=in_specs,
        out_specs=pl.BlockSpec((bt, 4 * Cp), lambda i: (i, 0)),
        scratch_shapes=[pltpu.VMEM((T + 2, bt, Cw), compute_dtype)],
        compiler_params=pltpu.CompilerParams(
            dimension_semantics=("parallel",),
            vmem_limit_bytes=vmem_limit),
    )(*args)

    # Strip batch / lane padding: (Bp, 4*Cp) -> (B, 4*C).
    out = out[:B]
    if Cp != C:
        out = out.reshape(B, 4, Cp)[:, :, :C].reshape(B, 4 * C)
    return out


def reference(sent, sent_len, params):
    """Pure-JAX reference mirroring the PyTorch ConvNetEncoder forward."""
    del sent_len
    x = jnp.transpose(sent, (1, 2, 0))        # (B, D, T)
    us = []
    for i in range(1, 5):
        w = params['w%d' % i]                 # (Cout, Cin, 3)
        b = params['b%d' % i]
        x = jax.lax.conv_general_dilated(
            x, w, window_strides=(1,), padding=((1, 1),),
            dimension_numbers=('NCH', 'OIH', 'NCH'))
        x = jnp.maximum(x + b[None, :, None], 0.0)
        us.append(jnp.max(x, axis=2))
    return jnp.concatenate(us, axis=1)


def init_params(key, word_emb_dim, enc_lstm_dim):
    D = word_emb_dim
    C = 2 * enc_lstm_dim
    cins = [D, C, C, C]
    keys = jax.random.split(key, 8)
    params = {}
    for li, cin in enumerate(cins, start=1):
        bound = 1.0 / np.sqrt(cin * 3)        # PyTorch Conv1d default init bound
        params['w%d' % li] = jax.random.uniform(
            keys[2 * (li - 1)], (C, cin, 3), jnp.float32, -bound, bound)
        params['b%d' % li] = jax.random.uniform(
            keys[2 * (li - 1) + 1], (C,), jnp.float32, -bound, bound)
    return params


if __name__ == "__main__":
    # config: word_emb_dim=32, enc_lstm_dim=32 (conv channels 2H=64), bsize=2, T=8
    T, B, D, H = 8, 2, 32, 32
    key = jax.random.PRNGKey(0)
    k_x, k_p = jax.random.split(key)

    sent = jax.random.normal(k_x, (T, B, D), jnp.float32)
    sent_len = np.array([8, 5], dtype=np.int32)   # unused by ConvNetEncoder.forward
    params = init_params(k_p, D, H)

    emb_ref = jax.block_until_ready(reference(sent, sent_len, params))

    # Default path: bf16 MXU operands, f32 accumulate / bias / ReLU / max.
    emb = jax.block_until_ready(convnet_encoder(sent, sent_len, params))
    assert emb.shape == (B, 8 * H), emb.shape
    np.testing.assert_allclose(np.asarray(emb), np.asarray(emb_ref),
                               rtol=6e-2, atol=6e-2)

    # f32 MXU-operand path (tighter tolerance).
    emb_f32 = jax.block_until_ready(
        convnet_encoder(sent, sent_len, params, compute_dtype=jnp.float32))
    np.testing.assert_allclose(np.asarray(emb_f32), np.asarray(emb_ref),
                               rtol=2e-2, atol=2e-2)

    print("KERNEL_OK")
</pallas_src>

<mosaic_0001>
module attributes {stable_mosaic.version = 11 : i64} {
  func.func @_convnet_encoder_kernel(%arg0: i32, %arg1: memref<8x16x128xbf16, #tpu.memory_space<vmem>>, %arg2: memref<384x128xbf16, #tpu.memory_space<vmem>>, %arg3: memref<1x128xf32, #tpu.memory_space<vmem>>, %arg4: memref<384x128xbf16, #tpu.memory_space<vmem>>, %arg5: memref<1x128xf32, #tpu.memory_space<vmem>>, %arg6: memref<384x128xbf16, #tpu.memory_space<vmem>>, %arg7: memref<1x128xf32, #tpu.memory_space<vmem>>, %arg8: memref<384x128xbf16, #tpu.memory_space<vmem>>, %arg9: memref<1x128xf32, #tpu.memory_space<vmem>>, %arg10: memref<16x512xf32, #tpu.memory_space<vmem>>, %arg11: memref<10x16x128xbf16, #tpu.memory_space<vmem>>) attributes {dimension_semantics = [#tpu.dimension_semantics<parallel>], iteration_bounds = array<i64: 1>, scalar_prefetch = 0 : i64, scratch_operands = 1 : i64, tpu.core_type = #tpu.core_type<tc>, window_params = [{transform_indices = @transform_0, window_bounds = array<i64: 8, 16, 128>}, {pipeline_mode = #tpu.pipeline_mode<synchronous>, transform_indices = @transform_1, window_bounds = array<i64: 384, 128>}, {pipeline_mode = #tpu.pipeline_mode<synchronous>, transform_indices = @transform_2, window_bounds = array<i64: 1, 128>}, {pipeline_mode = #tpu.pipeline_mode<synchronous>, transform_indices = @transform_3, window_bounds = array<i64: 384, 128>}, {pipeline_mode = #tpu.pipeline_mode<synchronous>, transform_indices = @transform_4, window_bounds = array<i64: 1, 128>}, {pipeline_mode = #tpu.pipeline_mode<synchronous>, transform_indices = @transform_5, window_bounds = array<i64: 384, 128>}, {pipeline_mode = #tpu.pipeline_mode<synchronous>, transform_indices = @transform_6, window_bounds = array<i64: 1, 128>}, {pipeline_mode = #tpu.pipeline_mode<synchronous>, transform_indices = @transform_7, window_bounds = array<i64: 384, 128>}, {pipeline_mode = #tpu.pipeline_mode<synchronous>, transform_indices = @transform_8, window_bounds = array<i64: 1, 128>}, {transform_indices = @transform_9, window_bounds = array<i64: 16, 512>}]} {
    %cst = arith.constant 0.000000e+00 : bf16
    %0 = vector.broadcast %cst : bf16 to vector<16x128xbf16>
    %c0 = arith.constant 0 : index
    %c0_0 = arith.constant 0 : index
    %c0_1 = arith.constant 0 : index
    %1 = vector.load %arg11[%c0, %c0_0, %c0_1] : memref<10x16x128xbf16, #tpu.memory_space<vmem>>, vector<1x16x128xbf16>
    %2 = vector.shape_cast %1 : vector<1x16x128xbf16> to vector<16x128xbf16>
    %3 = vector.shape_cast %0 : vector<16x128xbf16> to vector<1x16x128xbf16>
    tpu.vector_store %arg11[%c0, %c0_0, %c0_1], %3 {strides = array<i32>} : memref<10x16x128xbf16, #tpu.memory_space<vmem>>, vector<1x16x128xbf16>,
    %c9 = arith.constant 9 : index
    %c0_2 = arith.constant 0 : index
    %c0_3 = arith.constant 0 : index
    %4 = vector.load %arg11[%c9, %c0_2, %c0_3] : memref<10x16x128xbf16, #tpu.memory_space<vmem>>, vector<1x16x128xbf16>
    %5 = vector.shape_cast %4 : vector<1x16x128xbf16> to vector<16x128xbf16>
    %6 = vector.shape_cast %0 : vector<16x128xbf16> to vector<1x16x128xbf16>
    tpu.vector_store %arg11[%c9, %c0_2, %c0_3], %6 {strides = array<i32>} : memref<10x16x128xbf16, #tpu.memory_space<vmem>>, vector<1x16x128xbf16>,
    %c0_4 = arith.constant 0 : index
    %c0_5 = arith.constant 0 : index
    %c0_6 = arith.constant 0 : index
    %7 = vector.load %arg1[%c0_4, %c0_5, %c0_6] : memref<8x16x128xbf16, #tpu.memory_space<vmem>>, vector<8x16x128xbf16>
    %c1 = arith.constant 1 : index
    %c0_7 = arith.constant 0 : index
    %c0_8 = arith.constant 0 : index
    %8 = vector.load %arg11[%c1, %c0_7, %c0_8] : memref<10x16x128xbf16, #tpu.memory_space<vmem>>, vector<8x16x128xbf16>
    tpu.vector_store %arg11[%c1, %c0_7, %c0_8], %7 {strides = array<i32>} : memref<10x16x128xbf16, #tpu.memory_space<vmem>>, vector<8x16x128xbf16>,
    %c0_9 = arith.constant 0 : index
    %c0_10 = arith.constant 0 : index
    %c0_11 = arith.constant 0 : index
    %9 = vector.load %arg11[%c0_9, %c0_10, %c0_11] : memref<10x16x128xbf16, #tpu.memory_space<vmem>>, vector<8x16x128xbf16>
    %c1_12 = arith.constant 1 : index
    %c0_13 = arith.constant 0 : index
    %c0_14 = arith.constant 0 : index
    %10 = vector.load %arg11[%c1_12, %c0_13, %c0_14] : memref<10x16x128xbf16, #tpu.memory_space<vmem>>, vector<8x16x128xbf16>
    %c2 = arith.constant 2 : index
    %c0_15 = arith.constant 0 : index
    %c0_16 = arith.constant 0 : index
    %11 = vector.load %arg11[%c2, %c0_15, %c0_16] : memref<10x16x128xbf16, #tpu.memory_space<vmem>>, vector<8x16x128xbf16>
    %12 = tpu.concatenate %9, %10, %11 in 2 : vector<8x16x128xbf16>, vector<8x16x128xbf16>, vector<8x16x128xbf16> -> vector<8x16x384xbf16>
    %13 = vector.shape_cast %12 : vector<8x16x384xbf16> to vector<128x384xbf16>
    %c0_17 = arith.constant 0 : index
    %c0_18 = arith.constant 0 : index
    %14 = vector.load %arg2[%c0_17, %c0_18] : memref<384x128xbf16, #tpu.memory_space<vmem>>, vector<384x128xbf16>
    %cst_19 = arith.constant dense<0.000000e+00> : vector<128x128xf32>
    %15 = tpu.matmul %13, %14, %cst_19 {dimension_numbers = #tpu.dot_dimension_numbers<[1], [0], [0], [1], [0, 0, 1, 1], [], []>} : vector<128x384xbf16>, vector<384x128xbf16>, vector<128x128xf32> -> vector<128x128xf32>
    %16 = vector.shape_cast %15 : vector<128x128xf32> to vector<8x16x128xf32>
    %c0_20 = arith.constant 0 : index
    %c0_21 = arith.constant 0 : index
    %17 = vector.load %arg3[%c0_20, %c0_21] : memref<1x128xf32, #tpu.memory_space<vmem>>, vector<1x128xf32>
    %18 = vector.shape_cast %17 : vector<1x128xf32> to vector<1x1x128xf32>
    %19 = vector.broadcast %18 : vector<1x1x128xf32> to vector<8x16x128xf32>
    %20 = arith.addf %16, %19 : vector<8x16x128xf32>
    %cst_22 = arith.constant 0.000000e+00 : f32
    %21 = vector.broadcast %cst_22 : f32 to vector<8x16x128xf32>
    %22 = arith.maximumf %20, %21 : vector<8x16x128xf32>
    %cst_23 = arith.constant dense<0xFF800000> : vector<16x128xf32>
    %23 = vector.multi_reduction <maximumf>, %22, %cst_23 [0] : vector<8x16x128xf32> to vector<16x128xf32>
    %24 = arith.truncf %22 : vector<8x16x128xf32> to vector<8x16x128xbf16>
    %c1_24 = arith.constant 1 : index
    %c0_25 = arith.constant 0 : index
    %c0_26 = arith.constant 0 : index
    %25 = vector.load %arg11[%c1_24, %c0_25, %c0_26] : memref<10x16x128xbf16, #tpu.memory_space<vmem>>, vector<8x16x128xbf16>
    tpu.vector_store %arg11[%c1_24, %c0_25, %c0_26], %24 {strides = array<i32>} : memref<10x16x128xbf16, #tpu.memory_space<vmem>>, vector<8x16x128xbf16>,
    %c0_27 = arith.constant 0 : index
    %c0_28 = arith.constant 0 : index
    %c0_29 = arith.constant 0 : index
    %26 = vector.load %arg11[%c0_27, %c0_28, %c0_29] : memref<10x16x128xbf16, #tpu.memory_space<vmem>>, vector<8x16x128xbf16>
    %c1_30 = arith.constant 1 : index
    %c0_31 = arith.constant 0 : index
    %c0_32 = arith.constant 0 : index
    %27 = vector.load %arg11[%c1_30, %c0_31, %c0_32] : memref<10x16x128xbf16, #tpu.memory_space<vmem>>, vector<8x16x128xbf16>
    %c2_33 = arith.constant 2 : index
    %c0_34 = arith.constant 0 : index
    %c0_35 = arith.constant 0 : index
    %28 = vector.load %arg11[%c2_33, %c0_34, %c0_35] : memref<10x16x128xbf16, #tpu.memory_space<vmem>>, vector<8x16x128xbf16>
    %29 = tpu.concatenate %26, %27, %28 in 2 : vector<8x16x128xbf16>, vector<8x16x128xbf16>, vector<8x16x128xbf16> -> vector<8x16x384xbf16>
    %30 = vector.shape_cast %29 : vector<8x16x384xbf16> to vector<128x384xbf16>
    %c0_36 = arith.constant 0 : index
    %c0_37 = arith.constant 0 : index
    %31 = vector.load %arg4[%c0_36, %c0_37] : memref<384x128xbf16, #tpu.memory_space<vmem>>, vector<384x128xbf16>
    %cst_38 = arith.constant dense<0.000000e+00> : vector<128x128xf32>
    %32 = tpu.matmul %30, %31, %cst_38 {dimension_numbers = #tpu.dot_dimension_numbers<[1], [0], [0], [1], [0, 0, 1, 1], [], []>} : vector<128x384xbf16>, vector<384x128xbf16>, vector<128x128xf32> -> vector<128x128xf32>
    %33 = vector.shape_cast %32 : vector<128x128xf32> to vector<8x16x128xf32>
    %c0_39 = arith.constant 0 : index
    %c0_40 = arith.constant 0 : index
    %34 = vector.load %arg5[%c0_39, %c0_40] : memref<1x128xf32, #tpu.memory_space<vmem>>, vector<1x128xf32>
    %35 = vector.shape_cast %34 : vector<1x128xf32> to vector<1x1x128xf32>
    %36 = vector.broadcast %35 : vector<1x1x128xf32> to vector<8x16x128xf32>
    %37 = arith.addf %33, %36 : vector<8x16x128xf32>
    %cst_41 = arith.constant 0.000000e+00 : f32
    %38 = vector.broadcast %cst_41 : f32 to vector<8x16x128xf32>
    %39 = arith.maximumf %37, %38 : vector<8x16x128xf32>
    %cst_42 = arith.constant dense<0xFF800000> : vector<16x128xf32>
    %40 = vector.multi_reduction <maximumf>, %39, %cst_42 [0] : vector<8x16x128xf32> to vector<16x128xf32>
    %41 = arith.truncf %39 : vector<8x16x128xf32> to vector<8x16x128xbf16>
    %c1_43 = arith.constant 1 : index
    %c0_44 = arith.constant 0 : index
    %c0_45 = arith.constant 0 : index
    %42 = vector.load %arg11[%c1_43, %c0_44, %c0_45] : memref<10x16x128xbf16, #tpu.memory_space<vmem>>, vector<8x16x128xbf16>
    tpu.vector_store %arg11[%c1_43, %c0_44, %c0_45], %41 {strides = array<i32>} : memref<10x16x128xbf16, #tpu.memory_space<vmem>>, vector<8x16x128xbf16>,
    %c0_46 = arith.constant 0 : index
    %c0_47 = arith.constant 0 : index
    %c0_48 = arith.constant 0 : index
    %43 = vector.load %arg11[%c0_46, %c0_47, %c0_48] : memref<10x16x128xbf16, #tpu.memory_space<vmem>>, vector<8x16x128xbf16>
    %c1_49 = arith.constant 1 : index
    %c0_50 = arith.constant 0 : index
    %c0_51 = arith.constant 0 : index
    %44 = vector.load %arg11[%c1_49, %c0_50, %c0_51] : memref<10x16x128xbf16, #tpu.memory_space<vmem>>, vector<8x16x128xbf16>
    %c2_52 = arith.constant 2 : index
    %c0_53 = arith.constant 0 : index
    %c0_54 = arith.constant 0 : index
    %45 = vector.load %arg11[%c2_52, %c0_53, %c0_54] : memref<10x16x128xbf16, #tpu.memory_space<vmem>>, vector<8x16x128xbf16>
    %46 = tpu.concatenate %43, %44, %45 in 2 : vector<8x16x128xbf16>, vector<8x16x128xbf16>, vector<8x16x128xbf16> -> vector<8x16x384xbf16>
    %47 = vector.shape_cast %46 : vector<8x16x384xbf16> to vector<128x384xbf16>
    %c0_55 = arith.constant 0 : index
    %c0_56 = arith.constant 0 : index
    %48 = vector.load %arg6[%c0_55, %c0_56] : memref<384x128xbf16, #tpu.memory_space<vmem>>, vector<384x128xbf16>
    %cst_57 = arith.constant dense<0.000000e+00> : vector<128x128xf32>
    %49 = tpu.matmul %47, %48, %cst_57 {dimension_numbers = #tpu.dot_dimension_numbers<[1], [0], [0], [1], [0, 0, 1, 1], [], []>} : vector<128x384xbf16>, vector<384x128xbf16>, vector<128x128xf32> -> vector<128x128xf32>
    %50 = vector.shape_cast %49 : vector<128x128xf32> to vector<8x16x128xf32>
    %c0_58 = arith.constant 0 : index
    %c0_59 = arith.constant 0 : index
    %51 = vector.load %arg7[%c0_58, %c0_59] : memref<1x128xf32, #tpu.memory_space<vmem>>, vector<1x128xf32>
    %52 = vector.shape_cast %51 : vector<1x128xf32> to vector<1x1x128xf32>
    %53 = vector.broadcast %52 : vector<1x1x128xf32> to vector<8x16x128xf32>
    %54 = arith.addf %50, %53 : vector<8x16x128xf32>
    %cst_60 = arith.constant 0.000000e+00 : f32
    %55 = vector.broadcast %cst_60 : f32 to vector<8x16x128xf32>
    %56 = arith.maximumf %54, %55 : vector<8x16x128xf32>
    %cst_61 = arith.constant dense<0xFF800000> : vector<16x128xf32>
    %57 = vector.multi_reduction <maximumf>, %56, %cst_61 [0] : vector<8x16x128xf32> to vector<16x128xf32>
    %58 = arith.truncf %56 : vector<8x16x128xf32> to vector<8x16x128xbf16>
    %c1_62 = arith.constant 1 : index
    %c0_63 = arith.constant 0 : index
    %c0_64 = arith.constant 0 : index
    %59 = vector.load %arg11[%c1_62, %c0_63, %c0_64] : memref<10x16x128xbf16, #tpu.memory_space<vmem>>, vector<8x16x128xbf16>
    tpu.vector_store %arg11[%c1_62, %c0_63, %c0_64], %58 {strides = array<i32>} : memref<10x16x128xbf16, #tpu.memory_space<vmem>>, vector<8x16x128xbf16>,
    %c0_65 = arith.constant 0 : index
    %c0_66 = arith.constant 0 : index
    %c0_67 = arith.constant 0 : index
    %60 = vector.load %arg11[%c0_65, %c0_66, %c0_67] : memref<10x16x128xbf16, #tpu.memory_space<vmem>>, vector<8x16x128xbf16>
    %c1_68 = arith.constant 1 : index
    %c0_69 = arith.constant 0 : index
    %c0_70 = arith.constant 0 : index
    %61 = vector.load %arg11[%c1_68, %c0_69, %c0_70] : memref<10x16x128xbf16, #tpu.memory_space<vmem>>, vector<8x16x128xbf16>
    %c2_71 = arith.constant 2 : index
    %c0_72 = arith.constant 0 : index
    %c0_73 = arith.constant 0 : index
    %62 = vector.load %arg11[%c2_71, %c0_72, %c0_73] : memref<10x16x128xbf16, #tpu.memory_space<vmem>>, vector<8x16x128xbf16>
    %63 = tpu.concatenate %60, %61, %62 in 2 : vector<8x16x128xbf16>, vector<8x16x128xbf16>, vector<8x16x128xbf16> -> vector<8x16x384xbf16>
    %64 = vector.shape_cast %63 : vector<8x16x384xbf16> to vector<128x384xbf16>
    %c0_74 = arith.constant 0 : index
    %c0_75 = arith.constant 0 : index
    %65 = vector.load %arg8[%c0_74, %c0_75] : memref<384x128xbf16, #tpu.memory_space<vmem>>, vector<384x128xbf16>
    %cst_76 = arith.constant dense<0.000000e+00> : vector<128x128xf32>
    %66 = tpu.matmul %64, %65, %cst_76 {dimension_numbers = #tpu.dot_dimension_numbers<[1], [0], [0], [1], [0, 0, 1, 1], [], []>} : vector<128x384xbf16>, vector<384x128xbf16>, vector<128x128xf32> -> vector<128x128xf32>
    %67 = vector.shape_cast %66 : vector<128x128xf32> to vector<8x16x128xf32>
    %c0_77 = arith.constant 0 : index
    %c0_78 = arith.constant 0 : index
    %68 = vector.load %arg9[%c0_77, %c0_78] : memref<1x128xf32, #tpu.memory_space<vmem>>, vector<1x128xf32>
    %69 = vector.shape_cast %68 : vector<1x128xf32> to vector<1x1x128xf32>
    %70 = vector.broadcast %69 : vector<1x1x128xf32> to vector<8x16x128xf32>
    %71 = arith.addf %67, %70 : vector<8x16x128xf32>
    %cst_79 = arith.constant 0.000000e+00 : f32
    %72 = vector.broadcast %cst_79 : f32 to vector<8x16x128xf32>
    %73 = arith.maximumf %71, %72 : vector<8x16x128xf32>
    %cst_80 = arith.constant dense<0xFF800000> : vector<16x128xf32>
    %74 = vector.multi_reduction <maximumf>, %73, %cst_80 [0] : vector<8x16x128xf32> to vector<16x128xf32>
    %75 = tpu.concatenate %23, %40, %57, %74 in 1 : vector<16x128xf32>, vector<16x128xf32>, vector<16x128xf32>, vector<16x128xf32> -> vector<16x512xf32>
    %c0_81 = arith.constant 0 : index
    %c0_82 = arith.constant 0 : index
    %76 = vector.load %arg10[%c0_81, %c0_82] : memref<16x512xf32, #tpu.memory_space<vmem>>, vector<16x512xf32>
    tpu.vector_store %arg10[%c0_81, %c0_82], %75 {strides = array<i32>} : memref<16x512xf32, #tpu.memory_space<vmem>>, vector<16x512xf32>,
    return
  }
  func.func @transform_0(%arg0: i32) -> (i32, i32, i32) {
    %c0_i32 = arith.constant 0 : i32
    %c0_i32_0 = arith.constant 0 : i32
    %c0_i32_1 = arith.constant 0 : i32
    return %c0_i32, %arg0, %c0_i32_0 : i32, i32, i32
  }
  func.func @transform_1(%arg0: i32) -> (i32, i32) {
    %c0_i32 = arith.constant 0 : i32
    %c0_i32_0 = arith.constant 0 : i32
    %c0_i32_1 = arith.constant 0 : i32
    return %c0_i32, %c0_i32_0 : i32, i32
  }
  func.func @transform_2(%arg0: i32) -> (i32, i32) {
    %c0_i32 = arith.constant 0 : i32
    %c0_i32_0 = arith.constant 0 : i32
    %c0_i32_1 = arith.constant 0 : i32
    return %c0_i32, %c0_i32_0 : i32, i32
  }
  func.func @transform_3(%arg0: i32) -> (i32, i32) {
    %c0_i32 = arith.constant 0 : i32
    %c0_i32_0 = arith.constant 0 : i32
    %c0_i32_1 = arith.constant 0 : i32
    return %c0_i32, %c0_i32_0 : i32, i32
  }
  func.func @transform_4(%arg0: i32) -> (i32, i32) {
    %c0_i32 = arith.constant 0 : i32
    %c0_i32_0 = arith.constant 0 : i32
    %c0_i32_1 = arith.constant 0 : i32
    return %c0_i32, %c0_i32_0 : i32, i32
  }
  func.func @transform_5(%arg0: i32) -> (i32, i32) {
    %c0_i32 = arith.constant 0 : i32
    %c0_i32_0 = arith.constant 0 : i32
    %c0_i32_1 = arith.constant 0 : i32
    return %c0_i32, %c0_i32_0 : i32, i32
  }
  func.func @transform_6(%arg0: i32) -> (i32, i32) {
    %c0_i32 = arith.constant 0 : i32
    %c0_i32_0 = arith.constant 0 : i32
    %c0_i32_1 = arith.constant 0 : i32
    return %c0_i32, %c0_i32_0 : i32, i32
  }
  func.func @transform_7(%arg0: i32) -> (i32, i32) {
    %c0_i32 = arith.constant 0 : i32
    %c0_i32_0 = arith.constant 0 : i32
    %c0_i32_1 = arith.constant 0 : i32
    return %c0_i32, %c0_i32_0 : i32, i32
  }
  func.func @transform_8(%arg0: i32) -> (i32, i32) {
    %c0_i32 = arith.constant 0 : i32
    %c0_i32_0 = arith.constant 0 : i32
    %c0_i32_1 = arith.constant 0 : i32
    return %c0_i32, %c0_i32_0 : i32, i32
  }
  func.func @transform_9(%arg0: i32) -> (i32, i32) {
    %c0_i32 = arith.constant 0 : i32
    %c0_i32_0 = arith.constant 0 : i32
    return %arg0, %c0_i32 : i32, i32
  }
}

</mosaic_0001>

<llo_original>
// kernel: tpu_custom_call.1
$region0: #{tpu_custom_call.1}
  #allocation0 [shape = 'u32[]', space=smem, size = 0x4, offset = 0x4, fixed_abs, tag = 'smem constant byte address 0x4 - core index']
  #allocation1 [shape = 'u32[72,128]{1,0:T(1,128)}', space=vmem, size = 0x9000, scoped, tag = 'internal scratch']
  #allocation2 [shape = 'bf16[10,16,128]{2,1,0:T(8,128)(2,1)}', space=vmem, size = 0xa000, scoped, tag = 'scratch operand']
  %s0 = inlined_call_operand.hbm [shape: bf16[8,16,128], index: 0, kind: input, shape index: {}]
  %s1 = inlined_call_operand.hbm [shape: bf16[384,128], index: 1, kind: input, shape index: {}]
  %s2 = inlined_call_operand.vmem [shape: f32[1,128], index: 2, kind: input, shape index: {}]
  %s3 = inlined_call_operand.hbm [shape: bf16[384,128], index: 3, kind: input, shape index: {}]
  %s4 = inlined_call_operand.vmem [shape: f32[1,128], index: 4, kind: input, shape index: {}]
  %s5 = inlined_call_operand.hbm [shape: bf16[384,128], index: 5, kind: input, shape index: {}]
  %s6 = inlined_call_operand.vmem [shape: f32[1,128], index: 6, kind: input, shape index: {}]
  %s7 = inlined_call_operand.hbm [shape: bf16[384,128], index: 7, kind: input, shape index: {}]
  %s8 = inlined_call_operand.vmem [shape: f32[1,128], index: 8, kind: input, shape index: {}]
  %s9 = inlined_call_operand.hbm [shape: f32[16,512], index: 9, kind: output, shape index: {}]
  %s10 = sld [smem:[#allocation0]]
  $region66: #{tpu_custom_call.1} parent=0
    _
  %s12 = ssub.s32 1, %s10
  %s13 = scalar_select 0, %s12, %s10
  $region1: #{tpu_custom_call.1} parent=0
    #allocation3 [shape = 'u8[32768]{0}', space=vmem, size = 0x8000, scoped, tag = 'input window, operand 0, single buffered']
    #allocation4 [shape = 's32[1]{0}', space=sflag, size = 0x4, scoped, tag = 'scoped memory for tpu_custom_call.1']
    #allocation5 [shape = 's32[1]{0}', space=sflag, size = 0x4, scoped, tag = 'scoped memory for tpu_custom_call.1']
    #allocation6 [shape = 'u8[98304]{0}', space=vmem, size = 0x18000, scoped, tag = 'input window, operand 1, single buffered']
    #allocation7 [shape = 's32[1]{0}', space=sflag, size = 0x4, scoped, tag = 'scoped memory for tpu_custom_call.1']
    #allocation8 [shape = 'u8[98304]{0}', space=vmem, size = 0x18000, scoped, tag = 'input window, operand 3, single buffered']
    #allocation9 [shape = 'u8[98304]{0}', space=vmem, size = 0x18000, scoped, tag = 'input window, operand 5, single buffered']
    #allocation10 [shape = 's32[1]{0}', space=sflag, size = 0x4, scoped, tag = 'scoped memory for tpu_custom_call.1']
    #allocation11 [shape = 'u8[98304]{0}', space=vmem, size = 0x18000, scoped, tag = 'input window, operand 7, single buffered']
    #allocation12 [shape = 'u8[32768]{0}', space=vmem, size = 0x8000, scoped, tag = 'output window, operand 0, single buffered']
    %14 = vsyncpa [#allocation4], 0
    %15 = vsyncpa [#allocation7], 0
    %16 = vsyncpa [#allocation10], 0
    %17 = vsyncpa [#allocation5], 0
    // Predicated region
    $region2: #{tpu_custom_call.1} parent=1 // pred_check
      _
    $region3: #{tpu_custom_call.1} parent=1 // pred_check_branch
      %19 = sbr.rel (0) target = $region5
    $region4: #{tpu_custom_call.1} parent=1 // pred_region
      %21 = vsyncadd [#allocation4], 0
      %s22 = sshll.u32 %s0, 4
      %s23 = int_to_ptr.hbm [resolvable:$true] %s22
      %s24 = sshll.u32 [#allocation3], 4
      %s25 = int_to_ptr.vmem [resolvable:$true] %s24
      %30 = dma.hbm_to_vmem [thread:$0]  %s23, 1024, %s25, [#allocation4], 64, 64, 4
    $region5: #{tpu_custom_call.1} parent=1 // pred_fallthru
      _
    // Predicated region
    $region6: #{tpu_custom_call.1} parent=1 // pred_check
      _
    $region7: #{tpu_custom_call.1} parent=1 // pred_check_branch
      %32 = sbr.rel (0) target = $region9
    $region8: #{tpu_custom_call.1} parent=1 // pred_region
      %34 = vsyncadd [#allocation7], 0
      %s35 = sshll.u32 %s1, 4
      %s36 = int_to_ptr.hbm [resolvable:$true] %s35
      %s37 = sshll.u32 [#allocation6], 4
      %s38 = int_to_ptr.vmem [resolvable:$true] %s37
      %43 = dma.hbm_to_vmem [thread:$0]  %s36, 3072, %s38, [#allocation7], 64, 64, 4
    $region9: #{tpu_custom_call.1} parent=1 // pred_fallthru
      _
    // Predicated region
    $region10: #{tpu_custom_call.1} parent=1 // pred_check
      _
    $region11: #{tpu_custom_call.1} parent=1 // pred_check_branch
      %45 = sbr.rel (0) target = $region13
    $region12: #{tpu_custom_call.1} parent=1 // pred_region
      _
    $region13: #{tpu_custom_call.1} parent=1 // pred_fallthru
      _
    // Predicated region
    $region14: #{tpu_custom_call.1} parent=1 // pred_check
      _
    $region15: #{tpu_custom_call.1} parent=1 // pred_check_branch
      %47 = sbr.rel (0) target = $region17
    $region16: #{tpu_custom_call.1} parent=1 // pred_region
      %49 = vsyncadd [#allocation7], 0
      %s50 = sshll.u32 %s3, 4
      %s51 = int_to_ptr.hbm [resolvable:$true] %s50
      %s52 = sshll.u32 [#allocation8], 4
      %s53 = int_to_ptr.vmem [resolvable:$true] %s52
      %58 = dma.hbm_to_vmem [thread:$0]  %s51, 3072, %s53, [#allocation7], 64, 64, 4
    $region17: #{tpu_custom_call.1} parent=1 // pred_fallthru
      _
    // Predicated region
    $region18: #{tpu_custom_call.1} parent=1 // pred_check
      _
    $region19: #{tpu_custom_call.1} parent=1 // pred_check_branch
      %60 = sbr.rel (0) target = $region21
    $region20: #{tpu_custom_call.1} parent=1 // pred_region
      _
    $region21: #{tpu_custom_call.1} parent=1 // pred_fallthru
      _
    // Predicated region
    $region22: #{tpu_custom_call.1} parent=1 // pred_check
      _
    $region23: #{tpu_custom_call.1} parent=1 // pred_check_branch
      %62 = sbr.rel (0) target = $region25
    $region24: #{tpu_custom_call.1} parent=1 // pred_region
      %64 = vsyncadd [#allocation10], 0
      %s65 = sshll.u32 %s5, 4
      %s66 = int_to_ptr.hbm [resolvable:$true] %s65
      %s67 = sshll.u32 [#allocation9], 4
      %s68 = int_to_ptr.vmem [resolvable:$true] %s67
      %73 = dma.hbm_to_vmem [thread:$0]  %s66, 3072, %s68, [#allocation10], 64, 64, 4
    $region25: #{tpu_custom_call.1} parent=1 // pred_fallthru
      _
    // Predicated region
    $region26: #{tpu_custom_call.1} parent=1 // pred_check
      _
    $region27: #{tpu_custom_call.1} parent=1 // pred_check_branch
      %75 = sbr.rel (0) target = $region29
    $region28: #{tpu_custom_call.1} parent=1 // pred_region
      _
    $region29: #{tpu_custom_call.1} parent=1 // pred_fallthru
      _
    // Predicated region
    $region30: #{tpu_custom_call.1} parent=1 // pred_check
      _
    $region31: #{tpu_custom_call.1} parent=1 // pred_check_branch
      %77 = sbr.rel (0) target = $region33
    $region32: #{tpu_custom_call.1} parent=1 // pred_region
      %79 = vsyncadd [#allocation10], 0
      %s80 = sshll.u32 %s7, 4
      %s81 = int_to_ptr.hbm [resolvable:$true] %s80
      %s82 = sshll.u32 [#allocation11], 4
      %s83 = int_to_ptr.vmem [resolvable:$true] %s82
      %88 = dma.hbm_to_vmem [thread:$0]  %s81, 3072, %s83, [#allocation10], 64, 64, 4
    $region33: #{tpu_custom_call.1} parent=1 // pred_fallthru
      _
    // Predicated region
    $region34: #{tpu_custom_call.1} parent=1 // pred_check
      _
    $region35: #{tpu_custom_call.1} parent=1 // pred_check_branch
      %90 = sbr.rel (0) target = $region37
    $region36: #{tpu_custom_call.1} parent=1 // pred_region
      _
    $region37: #{tpu_custom_call.1} parent=1 // pred_fallthru
      _
    // Predicated region
    $region38: #{tpu_custom_call.1} parent=1 // pred_check
      _
    $region39: #{tpu_custom_call.1} parent=1 // pred_check_branch
      %92 = sbr.rel (0) target = $region41
    $region40: #{tpu_custom_call.1} parent=1 // pred_region
      %94 = dma.done [#allocation4], 1024
    $region41: #{tpu_custom_call.1} parent=1 // pred_fallthru
      _
    // Predicated region
    $region42: #{tpu_custom_call.1} parent=1 // pred_check
      _
    $region43: #{tpu_custom_call.1} parent=1 // pred_check_branch
      %96 = sbr.rel (0) target = $region45
    $region44: #{tpu_custom_call.1} parent=1 // pred_region
      %98 = dma.done [#allocation7], 3072
    $region45: #{tpu_custom_call.1} parent=1 // pred_fallthru
      _
    // Predicated region
    $region46: #{tpu_custom_call.1} parent=1 // pred_check
      _
    $region47: #{tpu_custom_call.1} parent=1 // pred_check_branch
      %100 = sbr.rel (0) target = $region49
    $region48: #{tpu_custom_call.1} parent=1 // pred_region
      %102 = dma.done [#allocation7], 3072
    $region49: #{tpu_custom_call.1} parent=1 // pred_fallthru
      _
    // Predicated region
    $region50: #{tpu_custom_call.1} parent=1 // pred_check
      _
    $region51: #{tpu_custom_call.1} parent=1 // pred_check_branch
      %104 = sbr.rel (0) target = $region53
    $region52: #{tpu_custom_call.1} parent=1 // pred_region
      %106 = dma.done [#allocation10], 3072
    $region53: #{tpu_custom_call.1} parent=1 // pred_fallthru
      _
    // Predicated region
    $region54: #{tpu_custom_call.1} parent=1 // pred_check
      _
    $region55: #{tpu_custom_call.1} parent=1 // pred_check_branch
      %108 = sbr.rel (0) target = $region57
    $region56: #{tpu_custom_call.1} parent=1 // pred_region
      %110 = dma.done [#allocation10], 3072
    $region57: #{tpu_custom_call.1} parent=1 // pred_fallthru
      _
    %112 = vst [vmem:[#allocation2] sm:$0xf] 0
    %113 = vst [vmem:[#allocation2 + $0x4] sm:$0xf] 0
    %s114 = scalar_lea.vmem [#allocation2], 72
    %115 = vst [vmem:[%s114] sm:$0xf] 0
    %116 = vst [vmem:[%s114 + $0x4] sm:$0xf] 0
    %v117 = vld [vmem:[#allocation3] sm:$0xf]
    %v118 = vld [vmem:[#allocation3 + $0x4] sm:$0xf]
    %v119 = vld [vmem:[#allocation3 + $0x8] sm:$0xf]
    %v120 = vld [vmem:[#allocation3 + $0xc] sm:$0xf]
    %v121 = vld [vmem:[#allocation3 + $0x10] sm:$0xf]
    %v122 = vld [vmem:[#allocation3 + $0x14] sm:$0xf]
    %v123 = vld [vmem:[#allocation3 + $0x18] sm:$0xf]
    %v124 = vld [vmem:[#allocation3 + $0x1c] sm:$0xf]
    %v125 = vld [vmem:[#allocation3 + $0x20] sm:$0xf]
    %v126 = vld [vmem:[#allocation3 + $0x24] sm:$0xf]
    %v127 = vld [vmem:[#allocation3 + $0x28] sm:$0xf]
    %v128 = vld [vmem:[#allocation3 + $0x2c] sm:$0xf]
    %v129 = vld [vmem:[#allocation3 + $0x30] sm:$0xf]
    %v130 = vld [vmem:[#allocation3 + $0x34] sm:$0xf]
    %v131 = vld [vmem:[#allocation3 + $0x38] sm:$0xf]
    %v132 = vld [vmem:[#allocation3 + $0x3c] sm:$0xf]
    %s133 = scalar_lea.vmem [#allocation2], 8
    %134 = vst [vmem:[%s133] sm:$0xf] %v117
    %135 = vst [vmem:[%s133 + $0x4] sm:$0xf] %v118
    %136 = vst [vmem:[%s133 + $0x8] sm:$0xf] %v119
    %137 = vst [vmem:[%s133 + $0xc] sm:$0xf] %v120
    %138 = vst [vmem:[%s133 + $0x10] sm:$0xf] %v121
    %139 = vst [vmem:[%s133 + $0x14] sm:$0xf] %v122
    %140 = vst [vmem:[%s133 + $0x18] sm:$0xf] %v123
    %141 = vst [vmem:[%s133 + $0x1c] sm:$0xf] %v124
    %142 = vst [vmem:[%s133 + $0x20] sm:$0xf] %v125
    %143 = vst [vmem:[%s133 + $0x24] sm:$0xf] %v126
    %144 = vst [vmem:[%s133 + $0x28] sm:$0xf] %v127
    %145 = vst [vmem:[%s133 + $0x2c] sm:$0xf] %v128
    %146 = vst [vmem:[%s133 + $0x30] sm:$0xf] %v129
    %147 = vst [vmem:[%s133 + $0x34] sm:$0xf] %v130
    %148 = vst [vmem:[%s133 + $0x38] sm:$0xf] %v131
    %149 = vst [vmem:[%s133 + $0x3c] sm:$0xf] %v132
    %v150 = vld [vmem:[#allocation2] sm:$0xf]
    %v151 = vld [vmem:[#allocation2 + $0x4] sm:$0xf]
    %v152 = vld [vmem:[#allocation2 + $0x8] sm:$0xf]
    %v153 = vld [vmem:[#allocation2 + $0xc] sm:$0xf]
    %v154 = vld [vmem:[#allocation2 + $0x10] sm:$0xf]
    %v155 = vld [vmem:[#allocation2 + $0x14] sm:$0xf]
    %v156 = vld [vmem:[#allocation2 + $0x18] sm:$0xf]
    %v157 = vld [vmem:[#allocation2 + $0x1c] sm:$0xf]
    %v158 = vld [vmem:[#allocation2 + $0x20] sm:$0xf]
    %v159 = vld [vmem:[#allocation2 + $0x24] sm:$0xf]
    %v160 = vld [vmem:[#allocation2 + $0x28] sm:$0xf]
    %v161 = vld [vmem:[#allocation2 + $0x2c] sm:$0xf]
    %v162 = vld [vmem:[#allocation2 + $0x30] sm:$0xf]
    %v163 = vld [vmem:[#allocation2 + $0x34] sm:$0xf]
    %v164 = vld [vmem:[#allocation2 + $0x38] sm:$0xf]
    %v165 = vld [vmem:[#allocation2 + $0x3c] sm:$0xf]
    %v166 = vld [vmem:[%s133] sm:$0xf]
    %v167 = vld [vmem:[%s133 + $0x4] sm:$0xf]
    %v168 = vld [vmem:[%s133 + $0x8] sm:$0xf]
    %v169 = vld [vmem:[%s133 + $0xc] sm:$0xf]
    %v170 = vld [vmem:[%s133 + $0x10] sm:$0xf]
    %v171 = vld [vmem:[%s133 + $0x14] sm:$0xf]
    %v172 = vld [vmem:[%s133 + $0x18] sm:$0xf]
    %v173 = vld [vmem:[%s133 + $0x1c] sm:$0xf]
    %v174 = vld [vmem:[%s133 + $0x20] sm:$0xf]
    %v175 = vld [vmem:[%s133 + $0x24] sm:$0xf]
    %v176 = vld [vmem:[%s133 + $0x28] sm:$0xf]
    %v177 = vld [vmem:[%s133 + $0x2c] sm:$0xf]
    %v178 = vld [vmem:[%s133 + $0x30] sm:$0xf]
    %v179 = vld [vmem:[%s133 + $0x34] sm:$0xf]
    %v180 = vld [vmem:[%s133 + $0x38] sm:$0xf]
    %v181 = vld [vmem:[%s133 + $0x3c] sm:$0xf]
    %s182 = scalar_lea.vmem [#allocation2], 16
    %v183 = vld [vmem:[%s182] sm:$0xf]
    %v184 = vld [vmem:[%s182 + $0x4] sm:$0xf]
    %v185 = vld [vmem:[%s182 + $0x8] sm:$0xf]
    %v186 = vld [vmem:[%s182 + $0xc] sm:$0xf]
    %v187 = vld [vmem:[%s182 + $0x10] sm:$0xf]
    %v188 = vld [vmem:[%s182 + $0x14] sm:$0xf]
    %v189 = vld [vmem:[%s182 + $0x18] sm:$0xf]
    %v190 = vld [vmem:[%s182 + $0x1c] sm:$0xf]
    %v191 = vld [vmem:[%s182 + $0x20] sm:$0xf]
    %v192 = vld [vmem:[%s182 + $0x24] sm:$0xf]
    %v193 = vld [vmem:[%s182 + $0x28] sm:$0xf]
    %v194 = vld [vmem:[%s182 + $0x2c] sm:$0xf]
    %v195 = vld [vmem:[%s182 + $0x30] sm:$0xf]
    %v196 = vld [vmem:[%s182 + $0x34] sm:$0xf]
    %v197 = vld [vmem:[%s182 + $0x38] sm:$0xf]
    %v198 = vld [vmem:[%s182 + $0x3c] sm:$0xf]
    %v215 = vunpack.c.l.b16 %v150
    %v216 = vunpack.c.l.b16 %v151
    %v217 = vunpack.c.l.b16 %v152
    %v218 = vunpack.c.l.b16 %v153
    %v219 = vunpack.c.l.b16 %v154
    %v220 = vunpack.c.l.b16 %v155
    %v221 = vunpack.c.l.b16 %v156
    %v222 = vunpack.c.l.b16 %v157
    %v223 = vunpack.c.l.b16 %v158
    %v224 = vunpack.c.l.b16 %v159
    %v225 = vunpack.c.l.b16 %v160
    %v226 = vunpack.c.l.b16 %v161
    %v227 = vunpack.c.l.b16 %v162
    %v228 = vunpack.c.l.b16 %v163
    %v229 = vunpack.c.l.b16 %v164
    %v230 = vunpack.c.l.b16 %v165
    %v231 = vpack.c.b16 %v216, %v215
    %v232 = vpack.c.b16 %v218, %v217
    %v233 = vpack.c.b16 %v220, %v219
    %v234 = vpack.c.b16 %v222, %v221
    %v235 = vpack.c.b16 %v224, %v223
    %v236 = vpack.c.b16 %v226, %v225
    %v237 = vpack.c.b16 %v228, %v227
    %v238 = vpack.c.b16 %v230, %v229
    %v263 = vunpack.c.l.b16 %v166
    %v264 = vunpack.c.l.b16 %v167
    %v265 = vunpack.c.l.b16 %v168
    %v266 = vunpack.c.l.b16 %v169
    %v267 = vunpack.c.l.b16 %v170
    %v268 = vunpack.c.l.b16 %v171
    %v269 = vunpack.c.l.b16 %v172
    %v270 = vunpack.c.l.b16 %v173
    %v271 = vunpack.c.l.b16 %v174
    %v272 = vunpack.c.l.b16 %v175
    %v273 = vunpack.c.l.b16 %v176
    %v274 = vunpack.c.l.b16 %v177
    %v275 = vunpack.c.l.b16 %v178
    %v276 = vunpack.c.l.b16 %v179
    %v277 = vunpack.c.l.b16 %v180
    %v278 = vunpack.c.l.b16 %v181
    %v279 = vpack.c.b16 %v264, %v263
    %v280 = vpack.c.b16 %v266, %v265
    %v281 = vpack.c.b16 %v268, %v267
    %v282 = vpack.c.b16 %v270, %v269
    %v283 = vpack.c.b16 %v272, %v271
    %v284 = vpack.c.b16 %v274, %v273
    %v285 = vpack.c.b16 %v276, %v275
    %v286 = vpack.c.b16 %v278, %v277
    %v311 = vunpack.c.l.b16 %v183
    %v312 = vunpack.c.l.b16 %v184
    %v313 = vunpack.c.l.b16 %v185
    %v314 = vunpack.c.l.b16 %v186
    %v315 = vunpack.c.l.b16 %v187
    %v316 = vunpack.c.l.b16 %v188
    %v317 = vunpack.c.l.b16 %v189
    %v318 = vunpack.c.l.b16 %v190
    %v319 = vunpack.c.l.b16 %v191
    %v320 = vunpack.c.l.b16 %v192
    %v321 = vunpack.c.l.b16 %v193
    %v322 = vunpack.c.l.b16 %v194
    %v323 = vunpack.c.l.b16 %v195
    %v324 = vunpack.c.l.b16 %v196
    %v325 = vunpack.c.l.b16 %v197
    %v326 = vunpack.c.l.b16 %v198
    %v327 = vpack.c.b16 %v312, %v311
    %v328 = vpack.c.b16 %v314, %v313
    %v329 = vpack.c.b16 %v316, %v315
    %v330 = vpack.c.b16 %v318, %v317
    %v331 = vpack.c.b16 %v320, %v319
    %v332 = vpack.c.b16 %v322, %v321
    %v333 = vpack.c.b16 %v324, %v323
    %v334 = vpack.c.b16 %v326, %v325
    %v343 = vld [vmem:[#allocation6] sm:$0xf]
    %v344 = vld [vmem:[#allocation6 + $0x4] sm:$0xf]
    %v345 = vld [vmem:[#allocation6 + $0x8] sm:$0xf]
    %v346 = vld [vmem:[#allocation6 + $0xc] sm:$0xf]
    %v347 = vld [vmem:[#allocation6 + $0x10] sm:$0xf]
    %v348 = vld [vmem:[#allocation6 + $0x14] sm:$0xf]
    %v349 = vld [vmem:[#allocation6 + $0x18] sm:$0xf]
    %v350 = vld [vmem:[#allocation6 + $0x1c] sm:$0xf]
    %v351 = vld [vmem:[#allocation6 + $0x20] sm:$0xf]
    %v352 = vld [vmem:[#allocation6 + $0x24] sm:$0xf]
    %v353 = vld [vmem:[#allocation6 + $0x28] sm:$0xf]
    %v354 = vld [vmem:[#allocation6 + $0x2c] sm:$0xf]
    %v355 = vld [vmem:[#allocation6 + $0x30] sm:$0xf]
    %v356 = vld [vmem:[#allocation6 + $0x34] sm:$0xf]
    %v357 = vld [vmem:[#allocation6 + $0x38] sm:$0xf]
    %v358 = vld [vmem:[#allocation6 + $0x3c] sm:$0xf]
    %v359 = vld [vmem:[#allocation6 + $0x40] sm:$0xf]
    %v360 = vld [vmem:[#allocation6 + $0x44] sm:$0xf]
    %v361 = vld [vmem:[#allocation6 + $0x48] sm:$0xf]
    %v362 = vld [vmem:[#allocation6 + $0x4c] sm:$0xf]
    %v363 = vld [vmem:[#allocation6 + $0x50] sm:$0xf]
    %v364 = vld [vmem:[#allocation6 + $0x54] sm:$0xf]
    %v365 = vld [vmem:[#allocation6 + $0x58] sm:$0xf]
    %v366 = vld [vmem:[#allocation6 + $0x5c] sm:$0xf]
    %v367 = vld [vmem:[#allocation6 + $0x60] sm:$0xf]
    %v368 = vld [vmem:[#allocation6 + $0x64] sm:$0xf]
    %v369 = vld [vmem:[#allocation6 + $0x68] sm:$0xf]
    %v370 = vld [vmem:[#allocation6 + $0x6c] sm:$0xf]
    %v371 = vld [vmem:[#allocation6 + $0x70] sm:$0xf]
    %v372 = vld [vmem:[#allocation6 + $0x74] sm:$0xf]
    %v373 = vld [vmem:[#allocation6 + $0x78] sm:$0xf]
    %v374 = vld [vmem:[#allocation6 + $0x7c] sm:$0xf]
    %v375 = vld [vmem:[#allocation6 + $0x80] sm:$0xf]
    %v376 = vld [vmem:[#allocation6 + $0x84] sm:$0xf]
    %v377 = vld [vmem:[#allocation6 + $0x88] sm:$0xf]
    %v378 = vld [vmem:[#allocation6 + $0x8c] sm:$0xf]
    %v379 = vld [vmem:[#allocation6 + $0x90] sm:$0xf]
    %v380 = vld [vmem:[#allocation6 + $0x94] sm:$0xf]
    %v381 = vld [vmem:[#allocation6 + $0x98] sm:$0xf]
    %v382 = vld [vmem:[#allocation6 + $0x9c] sm:$0xf]
    %v383 = vld [vmem:[#allocation6 + $0xa0] sm:$0xf]
    %v384 = vld [vmem:[#allocation6 + $0xa4] sm:$0xf]
    %v385 = vld [vmem:[#allocation6 + $0xa8] sm:$0xf]
    %v386 = vld [vmem:[#allocation6 + $0xac] sm:$0xf]
    %v387 = vld [vmem:[#allocation6 + $0xb0] sm:$0xf]
    %v388 = vld [vmem:[#allocation6 + $0xb4] sm:$0xf]
    %v389 = vld [vmem:[#allocation6 + $0xb8] sm:$0xf]
    %v390 = vld [vmem:[#allocation6 + $0xbc] sm:$0xf]
    %v439 = vunpack.c.l.b16 %v343
    %v440 = vunpack.c.l.b16 %v344
    %v441 = vunpack.c.l.b16 %v345
    %v442 = vunpack.c.l.b16 %v346
    %v443 = vunpack.c.l.b16 %v347
    %v444 = vunpack.c.l.b16 %v348
    %v445 = vunpack.c.l.b16 %v349
    %v446 = vunpack.c.l.b16 %v350
    %v447 = vunpack.c.l.b16 %v351
    %v448 = vunpack.c.l.b16 %v352
    %v449 = vunpack.c.l.b16 %v353
    %v450 = vunpack.c.l.b16 %v354
    %v451 = vunpack.c.l.b16 %v355
    %v452 = vunpack.c.l.b16 %v356
    %v453 = vunpack.c.l.b16 %v357
    %v454 = vunpack.c.l.b16 %v358
    %v455 = vunpack.c.l.b16 %v359
    %v456 = vunpack.c.l.b16 %v360
    %v457 = vunpack.c.l.b16 %v361
    %v458 = vunpack.c.l.b16 %v362
    %v459 = vunpack.c.l.b16 %v363
    %v460 = vunpack.c.l.b16 %v364
    %v461 = vunpack.c.l.b16 %v365
    %v462 = vunpack.c.l.b16 %v366
    %v463 = vunpack.c.l.b16 %v367
    %v464 = vunpack.c.l.b16 %v368
    %v465 = vunpack.c.l.b16 %v369
    %v466 = vunpack.c.l.b16 %v370
    %v467 = vunpack.c.l.b16 %v371
    %v468 = vunpack.c.l.b16 %v372
    %v469 = vunpack.c.l.b16 %v373
    %v470 = vunpack.c.l.b16 %v374
    %v471 = vunpack.c.l.b16 %v375
    %v472 = vunpack.c.l.b16 %v376
    %v473 = vunpack.c.l.b16 %v377
    %v474 = vunpack.c.l.b16 %v378
    %v475 = vunpack.c.l.b16 %v379
    %v476 = vunpack.c.l.b16 %v380
    %v477 = vunpack.c.l.b16 %v381
    %v478 = vunpack.c.l.b16 %v382
    %v479 = vunpack.c.l.b16 %v383
    %v480 = vunpack.c.l.b16 %v384
    %v481 = vunpack.c.l.b16 %v385
    %v482 = vunpack.c.l.b16 %v386
    %v483 = vunpack.c.l.b16 %v387
    %v484 = vunpack.c.l.b16 %v388
    %v485 = vunpack.c.l.b16 %v389
    %v486 = vunpack.c.l.b16 %v390
    %v487 = vpack.c.b16 %v440, %v439
    %v488 = vpack.c.b16 %v442, %v441
    %v489 = vpack.c.b16 %v444, %v443
    %v490 = vpack.c.b16 %v446, %v445
    %v491 = vpack.c.b16 %v448, %v447
    %v492 = vpack.c.b16 %v450, %v449
    %v493 = vpack.c.b16 %v452, %v451
    %v494 = vpack.c.b16 %v454, %v453
    %v495 = vpack.c.b16 %v456, %v455
    %v496 = vpack.c.b16 %v458, %v457
    %v497 = vpack.c.b16 %v460, %v459
    %v498 = vpack.c.b16 %v462, %v461
    %v499 = vpack.c.b16 %v464, %v463
    %v500 = vpack.c.b16 %v466, %v465
    %v501 = vpack.c.b16 %v468, %v467
    %v502 = vpack.c.b16 %v470, %v469
    %v503 = vpack.c.b16 %v472, %v471
    %v504 = vpack.c.b16 %v474, %v473
    %v505 = vpack.c.b16 %v476, %v475
    %v506 = vpack.c.b16 %v478, %v477
    %v507 = vpack.c.b16 %v480, %v479
    %v508 = vpack.c.b16 %v482, %v481
    %v509 = vpack.c.b16 %v484, %v483
    %v510 = vpack.c.b16 %v486, %v485
    %535 = vmatpush.bf16.msra.mxu0 %v494
    %536 = vmatpush.bf16.msra.mxu0 %v493
    %537 = vmatpush.bf16.msra.mxu0 %v492
    %538 = vmatpush.bf16.msra.mxu0 %v491
    %539 = vmatpush.bf16.msra.mxu0 %v490
    %540 = vmatpush.bf16.msra.mxu0 %v489
    %541 = vmatpush.bf16.msra.mxu0 %v488
    %542 = vmatpush.bf16.msra.mxu0 %v487
    %543 = vmatmul.bf16.gmra.mxu0 %v231
    %v544 = vpop.f32.mrf.mxu0
    %v545 = vadd.f32 0.0, %v544
    %v546 = vpop.f32.mrf.mxu0
    %v547 = vadd.f32 0.0, %v546
    %548 = vmatmul.bf16.gmra.mxu0 %v232
    %v549 = vpop.f32.mrf.mxu0
    %v550 = vadd.f32 0.0, %v549
    %v551 = vpop.f32.mrf.mxu0
    %v552 = vadd.f32 0.0, %v551
    %553 = vmatmul.bf16.gmra.mxu0 %v233
    %v554 = vpop.f32.mrf.mxu0
    %v555 = vadd.f32 0.0, %v554
    %v556 = vpop.f32.mrf.mxu0
    %v557 = vadd.f32 0.0, %v556
    %558 = vmatmul.bf16.gmra.mxu0 %v234
    %v559 = vpop.f32.mrf.mxu0
    %v560 = vadd.f32 0.0, %v559
    %v561 = vpop.f32.mrf.mxu0
    %v562 = vadd.f32 0.0, %v561
    %563 = vmatmul.bf16.gmra.mxu0 %v235
    %v564 = vpop.f32.mrf.mxu0
    %v565 = vadd.f32 0.0, %v564
    %v566 = vpop.f32.mrf.mxu0
    %v567 = vadd.f32 0.0, %v566
    %568 = vmatmul.bf16.gmra.mxu0 %v236
    %v569 = vpop.f32.mrf.mxu0
    %v570 = vadd.f32 0.0, %v569
    %v571 = vpop.f32.mrf.mxu0
    %v572 = vadd.f32 0.0, %v571
    %573 = vmatmul.bf16.gmra.mxu0 %v237
    %v574 = vpop.f32.mrf.mxu0
    %v575 = vadd.f32 0.0, %v574
    %v576 = vpop.f32.mrf.mxu0
    %v577 = vadd.f32 0.0, %v576
    %578 = vmatmul.bf16.gmra.mxu0 %v238
    %v579 = vpop.f32.mrf.mxu0
    %v580 = vadd.f32 0.0, %v579
    %v581 = vpop.f32.mrf.mxu0
    %v582 = vadd.f32 0.0, %v581
    %583 = vdwg.mxu0
    %584 = vmatpush.bf16.msra.mxu0 %v502
    %585 = vmatpush.bf16.msra.mxu0 %v501
    %586 = vmatpush.bf16.msra.mxu0 %v500
    %587 = vmatpush.bf16.msra.mxu0 %v499
    %588 = vmatpush.bf16.msra.mxu0 %v498
    %589 = vmatpush.bf16.msra.mxu0 %v497
    %590 = vmatpush.bf16.msra.mxu0 %v496
    %591 = vmatpush.bf16.msra.mxu0 %v495
    %592 = vmatmul.bf16.gmra.mxu0 %v279
    %v593 = vpop.f32.mrf.mxu0
    %v594 = vadd.f32 %v545, %v593
    %v595 = vpop.f32.mrf.mxu0
    %v596 = vadd.f32 %v547, %v595
    %597 = vmatmul.bf16.gmra.mxu0 %v280
    %v598 = vpop.f32.mrf.mxu0
    %v599 = vadd.f32 %v550, %v598
    %v600 = vpop.f32.mrf.mxu0
    %v601 = vadd.f32 %v552, %v600
    %602 = vmatmul.bf16.gmra.mxu0 %v281
    %v603 = vpop.f32.mrf.mxu0
    %v604 = vadd.f32 %v555, %v603
    %v605 = vpop.f32.mrf.mxu0
    %v606 = vadd.f32 %v557, %v605
    %607 = vmatmul.bf16.gmra.mxu0 %v282
    %v608 = vpop.f32.mrf.mxu0
    %v609 = vadd.f32 %v560, %v608
    %v610 = vpop.f32.mrf.mxu0
    %v611 = vadd.f32 %v562, %v610
    %612 = vmatmul.bf16.gmra.mxu0 %v283
    %v613 = vpop.f32.mrf.mxu0
    %v614 = vadd.f32 %v565, %v613
    %v615 = vpop.f32.mrf.mxu0
    %v616 = vadd.f32 %v567, %v615
    %617 = vmatmul.bf16.gmra.mxu0 %v284
    %v618 = vpop.f32.mrf.mxu0
    %v619 = vadd.f32 %v570, %v618
    %v620 = vpop.f32.mrf.mxu0
    %v621 = vadd.f32 %v572, %v620
    %622 = vmatmul.bf16.gmra.mxu0 %v285
    %v623 = vpop.f32.mrf.mxu0
    %v624 = vadd.f32 %v575, %v623
    %v625 = vpop.f32.mrf.mxu0
    %v626 = vadd.f32 %v577, %v625
    %627 = vmatmul.bf16.gmra.mxu0 %v286
    %v628 = vpop.f32.mrf.mxu0
    %v629 = vadd.f32 %v580, %v628
    %v630 = vpop.f32.mrf.mxu0
    %v631 = vadd.f32 %v582, %v630
    %632 = vdwg.mxu0
    %633 = vmatpush.bf16.msra.mxu0 %v510
    %634 = vmatpush.bf16.msra.mxu0 %v509
    %635 = vmatpush.bf16.msra.mxu0 %v508
    %636 = vmatpush.bf16.msra.mxu0 %v507
    %637 = vmatpush.bf16.msra.mxu0 %v506
    %638 = vmatpush.bf16.msra.mxu0 %v505
    %639 = vmatpush.bf16.msra.mxu0 %v504
    %640 = vmatpush.bf16.msra.mxu0 %v503
    %641 = vmatmul.bf16.gmra.mxu0 %v327
    %v642 = vpop.f32.mrf.mxu0
    %v643 = vadd.f32 %v594, %v642
    %v644 = vpop.f32.mrf.mxu0
    %v645 = vadd.f32 %v596, %v644
    %646 = vmatmul.bf16.gmra.mxu0 %v328
    %v647 = vpop.f32.mrf.mxu0
    %v648 = vadd.f32 %v599, %v647
    %v649 = vpop.f32.mrf.mxu0
    %v650 = vadd.f32 %v601, %v649
    %651 = vmatmul.bf16.gmra.mxu0 %v329
    %v652 = vpop.f32.mrf.mxu0
    %v653 = vadd.f32 %v604, %v652
    %v654 = vpop.f32.mrf.mxu0
    %v655 = vadd.f32 %v606, %v654
    %656 = vmatmul.bf16.gmra.mxu0 %v330
    %v657 = vpop.f32.mrf.mxu0
    %v658 = vadd.f32 %v609, %v657
    %v659 = vpop.f32.mrf.mxu0
    %v660 = vadd.f32 %v611, %v659
    %661 = vmatmul.bf16.gmra.mxu0 %v331
    %v662 = vpop.f32.mrf.mxu0
    %v663 = vadd.f32 %v614, %v662
    %v664 = vpop.f32.mrf.mxu0
    %v665 = vadd.f32 %v616, %v664
    %666 = vmatmul.bf16.gmra.mxu0 %v332
    %v667 = vpop.f32.mrf.mxu0
    %v668 = vadd.f32 %v619, %v667
    %v669 = vpop.f32.mrf.mxu0
    %v670 = vadd.f32 %v621, %v669
    %671 = vmatmul.bf16.gmra.mxu0 %v333
    %v672 = vpop.f32.mrf.mxu0
    %v673 = vadd.f32 %v624, %v672
    %v674 = vpop.f32.mrf.mxu0
    %v675 = vadd.f32 %v626, %v674
    %676 = vmatmul.bf16.gmra.mxu0 %v334
    %v677 = vpop.f32.mrf.mxu0
    %v678 = vadd.f32 %v629, %v677
    %v679 = vpop.f32.mrf.mxu0
    %v680 = vadd.f32 %v631, %v679
    %681 = vdwg.mxu0
    %v682 = vld [vmem:[%s2] sm:$0x1]
    %v684 = vperm.slane %v682, 0
    %v686 = vadd.f32 %v643, %v684
    %v687 = vadd.f32 %v645, %v684
    %v688 = vadd.f32 %v648, %v684
    %v689 = vadd.f32 %v650, %v684
    %v690 = vadd.f32 %v653, %v684
    %v691 = vadd.f32 %v655, %v684
    %v692 = vadd.f32 %v658, %v684
    %v693 = vadd.f32 %v660, %v684
    %v694 = vadd.f32 %v663, %v684
    %v695 = vadd.f32 %v665, %v684
    %v696 = vadd.f32 %v668, %v684
    %v697 = vadd.f32 %v670, %v684
    %v698 = vadd.f32 %v673, %v684
    %v699 = vadd.f32 %v675, %v684
    %v700 = vadd.f32 %v678, %v684
    %v701 = vadd.f32 %v680, %v684
    %v702 = vmax.f32 %v686, 0.0
    %v703 = vmax.f32 %v687, 0.0
    %v704 = vmax.f32 %v688, 0.0
    %v705 = vmax.f32 %v689, 0.0
    %v706 = vmax.f32 %v690, 0.0
    %v707 = vmax.f32 %v691, 0.0
    %v708 = vmax.f32 %v692, 0.0
    %v709 = vmax.f32 %v693, 0.0
    %v710 = vmax.f32 %v694, 0.0
    %v711 = vmax.f32 %v695, 0.0
    %v712 = vmax.f32 %v696, 0.0
    %v713 = vmax.f32 %v697, 0.0
    %v714 = vmax.f32 %v698, 0.0
    %v715 = vmax.f32 %v699, 0.0
    %v716 = vmax.f32 %v700, 0.0
    %v717 = vmax.f32 %v701, 0.0
    %v718 = vmax.f32 %v702, %v706
    %v719 = vmax.f32 %v704, %v708
    %v720 = vmax.f32 %v718, %v710
    %v721 = vmax.f32 %v719, %v712
    %v722 = vmax.f32 %v720, %v714
    %v723 = vmax.f32 %v721, %v716
    %v724 = vmax.f32 %v722, %v723
    %v725 = vmax.f32 %v703, %v707
    %v726 = vmax.f32 %v705, %v709
    %v727 = vmax.f32 %v725, %v711
    %v728 = vmax.f32 %v726, %v713
    %v729 = vmax.f32 %v727, %v715
    %v730 = vmax.f32 %v728, %v717
    %v731 = vmax.f32 %v729, %v730
    %v732 = vpack.c.bf16 %v702, %v702
    %v733 = vpack.c.bf16 %v703, %v703
    %v734 = vpack.c.bf16 %v704, %v704
    %v735 = vpack.c.bf16 %v705, %v705
    %v736 = vpack.c.bf16 %v706, %v706
    %v737 = vpack.c.bf16 %v707, %v707
    %v738 = vpack.c.bf16 %v708, %v708
    %v739 = vpack.c.bf16 %v709, %v709
    %v740 = vpack.c.bf16 %v710, %v710
    %v741 = vpack.c.bf16 %v711, %v711
    %v742 = vpack.c.bf16 %v712, %v712
    %v743 = vpack.c.bf16 %v713, %v713
    %v744 = vpack.c.bf16 %v714, %v714
    %v745 = vpack.c.bf16 %v715, %v715
    %v746 = vpack.c.bf16 %v716, %v716
    %v747 = vpack.c.bf16 %v717, %v717
    %748 = vst [vmem:[%s133] sm:$0xf] %v732
    %749 = vst [vmem:[%s133 + $0x4] sm:$0xf] %v733
    %750 = vst [vmem:[%s133 + $0x8] sm:$0xf] %v734
    %751 = vst [vmem:[%s133 + $0xc] sm:$0xf] %v735
    %752 = vst [vmem:[%s133 + $0x10] sm:$0xf] %v736
    %753 = vst [vmem:[%s133 + $0x14] sm:$0xf] %v737
    %754 = vst [vmem:[%s133 + $0x18] sm:$0xf] %v738
    %755 = vst [vmem:[%s133 + $0x1c] sm:$0xf] %v739
    %756 = vst [vmem:[%s133 + $0x20] sm:$0xf] %v740
    %757 = vst [vmem:[%s133 + $0x24] sm:$0xf] %v741
    %758 = vst [vmem:[%s133 + $0x28] sm:$0xf] %v742
    %759 = vst [vmem:[%s133 + $0x2c] sm:$0xf] %v743
    %760 = vst [vmem:[%s133 + $0x30] sm:$0xf] %v744
    %761 = vst [vmem:[%s133 + $0x34] sm:$0xf] %v745
    %762 = vst [vmem:[%s133 + $0x38] sm:$0xf] %v746
    %763 = vst [vmem:[%s133 + $0x3c] sm:$0xf] %v747
    %v764 = vld [vmem:[#allocation2] sm:$0xf]
    %v765 = vld [vmem:[#allocation2 + $0x4] sm:$0xf]
    %v766 = vld [vmem:[#allocation2 + $0x8] sm:$0xf]
    %v767 = vld [vmem:[#allocation2 + $0xc] sm:$0xf]
    %v768 = vld [vmem:[#allocation2 + $0x10] sm:$0xf]
    %v769 = vld [vmem:[#allocation2 + $0x14] sm:$0xf]
    %v770 = vld [vmem:[#allocation2 + $0x18] sm:$0xf]
    %v771 = vld [vmem:[#allocation2 + $0x1c] sm:$0xf]
    %v772 = vld [vmem:[#allocation2 + $0x20] sm:$0xf]
    %v773 = vld [vmem:[#allocation2 + $0x24] sm:$0xf]
    %v774 = vld [vmem:[#allocation2 + $0x28] sm:$0xf]
    %v775 = vld [vmem:[#allocation2 + $0x2c] sm:$0xf]
    %v776 = vld [vmem:[#allocation2 + $0x30] sm:$0xf]
    %v777 = vld [vmem:[#allocation2 + $0x34] sm:$0xf]
    %v778 = vld [vmem:[#allocation2 + $0x38] sm:$0xf]
    %v779 = vld [vmem:[#allocation2 + $0x3c] sm:$0xf]
    %v780 = vld [vmem:[%s133] sm:$0xf]
    %v781 = vld [vmem:[%s133 + $0x4] sm:$0xf]
    %v782 = vld [vmem:[%s133 + $0x8] sm:$0xf]
    %v783 = vld [vmem:[%s133 + $0xc] sm:$0xf]
    %v784 = vld [vmem:[%s133 + $0x10] sm:$0xf]
    %v785 = vld [vmem:[%s133 + $0x14] sm:$0xf]
    %v786 = vld [vmem:[%s133 + $0x18] sm:$0xf]
    %v787 = vld [vmem:[%s133 + $0x1c] sm:$0xf]
    %v788 = vld [vmem:[%s133 + $0x20] sm:$0xf]
    %v789 = vld [vmem:[%s133 + $0x24] sm:$0xf]
    %v790 = vld [vmem:[%s133 + $0x28] sm:$0xf]
    %v791 = vld [vmem:[%s133 + $0x2c] sm:$0xf]
    %v792 = vld [vmem:[%s133 + $0x30] sm:$0xf]
    %v793 = vld [vmem:[%s133 + $0x34] sm:$0xf]
    %v794 = vld [vmem:[%s133 + $0x38] sm:$0xf]
    %v795 = vld [vmem:[%s133 + $0x3c] sm:$0xf]
    %v796 = vld [vmem:[%s182] sm:$0xf]
    %v797 = vld [vmem:[%s182 + $0x4] sm:$0xf]
    %v798 = vld [vmem:[%s182 + $0x8] sm:$0xf]
    %v799 = vld [vmem:[%s182 + $0xc] sm:$0xf]
    %v800 = vld [vmem:[%s182 + $0x10] sm:$0xf]
    %v801 = vld [vmem:[%s182 + $0x14] sm:$0xf]
    %v802 = vld [vmem:[%s182 + $0x18] sm:$0xf]
    %v803 = vld [vmem:[%s182 + $0x1c] sm:$0xf]
    %v804 = vld [vmem:[%s182 + $0x20] sm:$0xf]
    %v805 = vld [vmem:[%s182 + $0x24] sm:$0xf]
    %v806 = vld [vmem:[%s182 + $0x28] sm:$0xf]
    %v807 = vld [vmem:[%s182 + $0x2c] sm:$0xf]
    %v808 = vld [vmem:[%s182 + $0x30] sm:$0xf]
    %v809 = vld [vmem:[%s182 + $0x34] sm:$0xf]
    %v810 = vld [vmem:[%s182 + $0x38] sm:$0xf]
    %v811 = vld [vmem:[%s182 + $0x3c] sm:$0xf]
    %v828 = vunpack.c.l.b16 %v764
    %v829 = vunpack.c.l.b16 %v765
    %v830 = vunpack.c.l.b16 %v766
    %v831 = vunpack.c.l.b16 %v767
    %v832 = vunpack.c.l.b16 %v768
    %v833 = vunpack.c.l.b16 %v769
    %v834 = vunpack.c.l.b16 %v770
    %v835 = vunpack.c.l.b16 %v771
    %v836 = vunpack.c.l.b16 %v772
    %v837 = vunpack.c.l.b16 %v773
    %v838 = vunpack.c.l.b16 %v774
    %v839 = vunpack.c.l.b16 %v775
    %v840 = vunpack.c.l.b16 %v776
    %v841 = vunpack.c.l.b16 %v777
    %v842 = vunpack.c.l.b16 %v778
    %v843 = vunpack.c.l.b16 %v779
    %v844 = vpack.c.b16 %v829, %v828
    %v845 = vpack.c.b16 %v831, %v830
    %v846 = vpack.c.b16 %v833, %v832
    %v847 = vpack.c.b16 %v835, %v834
    %v848 = vpack.c.b16 %v837, %v836
    %v849 = vpack.c.b16 %v839, %v838
    %v850 = vpack.c.b16 %v841, %v840
    %v851 = vpack.c.b16 %v843, %v842
    %v876 = vunpack.c.l.b16 %v780
    %v877 = vunpack.c.l.b16 %v781
    %v878 = vunpack.c.l.b16 %v782
    %v879 = vunpack.c.l.b16 %v783
    %v880 = vunpack.c.l.b16 %v784
    %v881 = vunpack.c.l.b16 %v785
    %v882 = vunpack.c.l.b16 %v786
    %v883 = vunpack.c.l.b16 %v787
    %v884 = vunpack.c.l.b16 %v788
    %v885 = vunpack.c.l.b16 %v789
    %v886 = vunpack.c.l.b16 %v790
    %v887 = vunpack.c.l.b16 %v791
    %v888 = vunpack.c.l.b16 %v792
    %v889 = vunpack.c.l.b16 %v793
    %v890 = vunpack.c.l.b16 %v794
    %v891 = vunpack.c.l.b16 %v795
    %v892 = vpack.c.b16 %v877, %v876
    %v893 = vpack.c.b16 %v879, %v878
    %v894 = vpack.c.b16 %v881, %v880
    %v895 = vpack.c.b16 %v883, %v882
    %v896 = vpack.c.b16 %v885, %v884
    %v897 = vpack.c.b16 %v887, %v886
    %v898 = vpack.c.b16 %v889, %v888
    %v899 = vpack.c.b16 %v891, %v890
    %v924 = vunpack.c.l.b16 %v796
    %v925 = vunpack.c.l.b16 %v797
    %v926 = vunpack.c.l.b16 %v798
    %v927 = vunpack.c.l.b16 %v799
    %v928 = vunpack.c.l.b16 %v800
    %v929 = vunpack.c.l.b16 %v801
    %v930 = vunpack.c.l.b16 %v802
    %v931 = vunpack.c.l.b16 %v803
    %v932 = vunpack.c.l.b16 %v804
    %v933 = vunpack.c.l.b16 %v805
    %v934 = vunpack.c.l.b16 %v806
    %v935 = vunpack.c.l.b16 %v807
    %v936 = vunpack.c.l.b16 %v808
    %v937 = vunpack.c.l.b16 %v809
    %v938 = vunpack.c.l.b16 %v810
    %v939 = vunpack.c.l.b16 %v811
    %v940 = vpack.c.b16 %v925, %v924
    %v941 = vpack.c.b16 %v927, %v926
    %v942 = vpack.c.b16 %v929, %v928
    %v943 = vpack.c.b16 %v931, %v930
    %v944 = vpack.c.b16 %v933, %v932
    %v945 = vpack.c.b16 %v935, %v934
    %v946 = vpack.c.b16 %v937, %v936
    %v947 = vpack.c.b16 %v939, %v938
    %v956 = vld [vmem:[#allocation8] sm:$0xf]
    %v957 = vld [vmem:[#allocation8 + $0x4] sm:$0xf]
    %v958 = vld [vmem:[#allocation8 + $0x8] sm:$0xf]
    %v959 = vld [vmem:[#allocation8 + $0xc] sm:$0xf]
    %v960 = vld [vmem:[#allocation8 + $0x10] sm:$0xf]
    %v961 = vld [vmem:[#allocation8 + $0x14] sm:$0xf]
    %v962 = vld [vmem:[#allocation8 + $0x18] sm:$0xf]
    %v963 = vld [vmem:[#allocation8 + $0x1c] sm:$0xf]
    %v964 = vld [vmem:[#allocation8 + $0x20] sm:$0xf]
    %v965 = vld [vmem:[#allocation8 + $0x24] sm:$0xf]
    %v966 = vld [vmem:[#allocation8 + $0x28] sm:$0xf]
    %v967 = vld [vmem:[#allocation8 + $0x2c] sm:$0xf]
    %v968 = vld [vmem:[#allocation8 + $0x30] sm:$0xf]
    %v969 = vld [vmem:[#allocation8 + $0x34] sm:$0xf]
    %v970 = vld [vmem:[#allocation8 + $0x38] sm:$0xf]
    %v971 = vld [vmem:[#allocation8 + $0x3c] sm:$0xf]
    %v972 = vld [vmem:[#allocation8 + $0x40] sm:$0xf]
    %v973 = vld [vmem:[#allocation8 + $0x44] sm:$0xf]
    %v974 = vld [vmem:[#allocation8 + $0x48] sm:$0xf]
    %v975 = vld [vmem:[#allocation8 + $0x4c] sm:$0xf]
    %v976 = vld [vmem:[#allocation8 + $0x50] sm:$0xf]
    %v977 = vld [vmem:[#allocation8 + $0x54] sm:$0xf]
    %v978 = vld [vmem:[#allocation8 + $0x58] sm:$0xf]
    %v979 = vld [vmem:[#allocation8 + $0x5c] sm:$0xf]
    %v980 = vld [vmem:[#allocation8 + $0x60] sm:$0xf]
    %v981 = vld [vmem:[#allocation8 + $0x64] sm:$0xf]
    %v982 = vld [vmem:[#allocation8 + $0x68] sm:$0xf]
    %v983 = vld [vmem:[#allocation8 + $0x6c] sm:$0xf]
    %v984 = vld [vmem:[#allocation8 + $0x70] sm:$0xf]
    %v985 = vld [vmem:[#allocation8 + $0x74] sm:$0xf]
    %v986 = vld [vmem:[#allocation8 + $0x78] sm:$0xf]
    %v987 = vld [vmem:[#allocation8 + $0x7c] sm:$0xf]
    %v988 = vld [vmem:[#allocation8 + $0x80] sm:$0xf]
    %v989 = vld [vmem:[#allocation8 + $0x84] sm:$0xf]
    %v990 = vld [vmem:[#allocation8 + $0x88] sm:$0xf]
    %v991 = vld [vmem:[#allocation8 + $0x8c] sm:$0xf]
    %v992 = vld [vmem:[#allocation8 + $0x90] sm:$0xf]
    %v993 = vld [vmem:[#allocation8 + $0x94] sm:$0xf]
    %v994 = vld [vmem:[#allocation8 + $0x98] sm:$0xf]
    %v995 = vld [vmem:[#allocation8 + $0x9c] sm:$0xf]
    %v996 = vld [vmem:[#allocation8 + $0xa0] sm:$0xf]
    %v997 = vld [vmem:[#allocation8 + $0xa4] sm:$0xf]
    %v998 = vld [vmem:[#allocation8 + $0xa8] sm:$0xf]
    %v999 = vld [vmem:[#allocation8 + $0xac] sm:$0xf]
    %v1000 = vld [vmem:[#allocation8 + $0xb0] sm:$0xf]
    %v1001 = vld [vmem:[#allocation8 + $0xb4] sm:$0xf]
    %v1002 = vld [vmem:[#allocation8 + $0xb8] sm:$0xf]
    %v1003 = vld [vmem:[#allocation8 + $0xbc] sm:$0xf]
    %v1052 = vunpack.c.l.b16 %v956
    %v1053 = vunpack.c.l.b16 %v957
    %v1054 = vunpack.c.l.b16 %v958
    %v1055 = vunpack.c.l.b16 %v959
    %v1056 = vunpack.c.l.b16 %v960
    %v1057 = vunpack.c.l.b16 %v961
    %v1058 = vunpack.c.l.b16 %v962
    %v1059 = vunpack.c.l.b16 %v963
    %v1060 = vunpack.c.l.b16 %v964
    %v1061 = vunpack.c.l.b16 %v965
    %v1062 = vunpack.c.l.b16 %v966
    %v1063 = vunpack.c.l.b16 %v967
    %v1064 = vunpack.c.l.b16 %v968
    %v1065 = vunpack.c.l.b16 %v969
    %v1066 = vunpack.c.l.b16 %v970
    %v1067 = vunpack.c.l.b16 %v971
    %v1068 = vunpack.c.l.b16 %v972
    %v1069 = vunpack.c.l.b16 %v973
    %v1070 = vunpack.c.l.b16 %v974
    %v1071 = vunpack.c.l.b16 %v975
    %v1072 = vunpack.c.l.b16 %v976
    %v1073 = vunpack.c.l.b16 %v977
    %v1074 = vunpack.c.l.b16 %v978
    %v1075 = vunpack.c.l.b16 %v979
    %v1076 = vunpack.c.l.b16 %v980
    %v1077 = vunpack.c.l.b16 %v981
    %v1078 = vunpack.c.l.b16 %v982
    %v1079 = vunpack.c.l.b16 %v983
    %v1080 = vunpack.c.l.b16 %v984
    %v1081 = vunpack.c.l.b16 %v985
    %v1082 = vunpack.c.l.b16 %v986
    %v1083 = vunpack.c.l.b16 %v987
    %v1084 = vunpack.c.l.b16 %v988
    %v1085 = vunpack.c.l.b16 %v989
    %v1086 = vunpack.c.l.b16 %v990
    %v1087 = vunpack.c.l.b16 %v991
    %v1088 = vunpack.c.l.b16 %v992
    %v1089 = vunpack.c.l.b16 %v993
    %v1090 = vunpack.c.l.b16 %v994
    %v1091 = vunpack.c.l.b16 %v995
    %v1092 = vunpack.c.l.b16 %v996
    %v1093 = vunpack.c.l.b16 %v997
    %v1094 = vunpack.c.l.b16 %v998
    %v1095 = vunpack.c.l.b16 %v999
    %v1096 = vunpack.c.l.b16 %v1000
    %v1097 = vunpack.c.l.b16 %v1001
    %v1098 = vunpack.c.l.b16 %v1002
    %v1099 = vunpack.c.l.b16 %v1003
    %v1100 = vpack.c.b16 %v1053, %v1052
    %v1101 = vpack.c.b16 %v1055, %v1054
    %v1102 = vpack.c.b16 %v1057, %v1056
    %v1103 = vpack.c.b16 %v1059, %v1058
    %v1104 = vpack.c.b16 %v1061, %v1060
    %v1105 = vpack.c.b16 %v1063, %v1062
    %v1106 = vpack.c.b16 %v1065, %v1064
    %v1107 = vpack.c.b16 %v1067, %v1066
    %v1108 = vpack.c.b16 %v1069, %v1068
    %v1109 = vpack.c.b16 %v1071, %v1070
    %v1110 = vpack.c.b16 %v1073, %v1072
    %v1111 = vpack.c.b16 %v1075, %v1074
    %v1112 = vpack.c.b16 %v1077, %v1076
    %v1113 = vpack.c.b16 %v1079, %v1078
    %v1114 = vpack.c.b16 %v1081, %v1080
    %v1115 = vpack.c.b16 %v1083, %v1082
    %v1116 = vpack.c.b16 %v1085, %v1084
    %v1117 = vpack.c.b16 %v1087, %v1086
    %v1118 = vpack.c.b16 %v1089, %v1088
    %v1119 = vpack.c.b16 %v1091, %v1090
    %v1120 = vpack.c.b16 %v1093, %v1092
    %v1121 = vpack.c.b16 %v1095, %v1094
    %v1122 = vpack.c.b16 %v1097, %v1096
    %v1123 = vpack.c.b16 %v1099, %v1098
    %1148 = vmatpush.bf16.msra.mxu0 %v1107
    %1149 = vmatpush.bf16.msra.mxu0 %v1106
    %1150 = vmatpush.bf16.msra.mxu0 %v1105
    %1151 = vmatpush.bf16.msra.mxu0 %v1104
    %1152 = vmatpush.bf16.msra.mxu0 %v1103
    %1153 = vmatpush.bf16.msra.mxu0 %v1102
    %1154 = vmatpush.bf16.msra.mxu0 %v1101
    %1155 = vmatpush.bf16.msra.mxu0 %v1100
    %1156 = vmatmul.bf16.gmra.mxu0 %v844
    %v1157 = vpop.f32.mrf.mxu0
    %v1158 = vadd.f32 0.0, %v1157
    %v1159 = vpop.f32.mrf.mxu0
    %v1160 = vadd.f32 0.0, %v1159
    %1161 = vmatmul.bf16.gmra.mxu0 %v845
    %v1162 = vpop.f32.mrf.mxu0
    %v1163 = vadd.f32 0.0, %v1162
    %v1164 = vpop.f32.mrf.mxu0
    %v1165 = vadd.f32 0.0, %v1164
    %1166 = vmatmul.bf16.gmra.mxu0 %v846
    %v1167 = vpop.f32.mrf.mxu0
    %v1168 = vadd.f32 0.0, %v1167
    %v1169 = vpop.f32.mrf.mxu0
    %v1170 = vadd.f32 0.0, %v1169
    %1171 = vmatmul.bf16.gmra.mxu0 %v847
    %v1172 = vpop.f32.mrf.mxu0
    %v1173 = vadd.f32 0.0, %v1172
    %v1174 = vpop.f32.mrf.mxu0
    %v1175 = vadd.f32 0.0, %v1174
    %1176 = vmatmul.bf16.gmra.mxu0 %v848
    %v1177 = vpop.f32.mrf.mxu0
    %v1178 = vadd.f32 0.0, %v1177
    %v1179 = vpop.f32.mrf.mxu0
    %v1180 = vadd.f32 0.0, %v1179
    %1181 = vmatmul.bf16.gmra.mxu0 %v849
    %v1182 = vpop.f32.mrf.mxu0
    %v1183 = vadd.f32 0.0, %v1182
    %v1184 = vpop.f32.mrf.mxu0
    %v1185 = vadd.f32 0.0, %v1184
    %1186 = vmatmul.bf16.gmra.mxu0 %v850
    %v1187 = vpop.f32.mrf.mxu0
    %v1188 = vadd.f32 0.0, %v1187
    %v1189 = vpop.f32.mrf.mxu0
    %v1190 = vadd.f32 0.0, %v1189
    %1191 = vmatmul.bf16.gmra.mxu0 %v851
    %v1192 = vpop.f32.mrf.mxu0
    %v1193 = vadd.f32 0.0, %v1192
    %v1194 = vpop.f32.mrf.mxu0
    %v1195 = vadd.f32 0.0, %v1194
    %1196 = vdwg.mxu0
    %1197 = vmatpush.bf16.msra.mxu0 %v1115
    %1198 = vmatpush.bf16.msra.mxu0 %v1114
    %1199 = vmatpush.bf16.msra.mxu0 %v1113
    %1200 = vmatpush.bf16.msra.mxu0 %v1112
    %1201 = vmatpush.bf16.msra.mxu0 %v1111
    %1202 = vmatpush.bf16.msra.mxu0 %v1110
    %1203 = vmatpush.bf16.msra.mxu0 %v1109
    %1204 = vmatpush.bf16.msra.mxu0 %v1108
    %1205 = vmatmul.bf16.gmra.mxu0 %v892
    %v1206 = vpop.f32.mrf.mxu0
    %v1207 = vadd.f32 %v1158, %v1206
    %v1208 = vpop.f32.mrf.mxu0
    %v1209 = vadd.f32 %v1160, %v1208
    %1210 = vmatmul.bf16.gmra.mxu0 %v893
    %v1211 = vpop.f32.mrf.mxu0
    %v1212 = vadd.f32 %v1163, %v1211
    %v1213 = vpop.f32.mrf.mxu0
    %v1214 = vadd.f32 %v1165, %v1213
    %1215 = vmatmul.bf16.gmra.mxu0 %v894
    %v1216 = vpop.f32.mrf.mxu0
    %v1217 = vadd.f32 %v1168, %v1216
    %v1218 = vpop.f32.mrf.mxu0
    %v1219 = vadd.f32 %v1170, %v1218
    %1220 = vmatmul.bf16.gmra.mxu0 %v895
    %v1221 = vpop.f32.mrf.mxu0
    %v1222 = vadd.f32 %v1173, %v1221
    %v1223 = vpop.f32.mrf.mxu0
    %v1224 = vadd.f32 %v1175, %v1223
    %1225 = vmatmul.bf16.gmra.mxu0 %v896
    %v1226 = vpop.f32.mrf.mxu0
    %v1227 = vadd.f32 %v1178, %v1226
    %v1228 = vpop.f32.mrf.mxu0
    %v1229 = vadd.f32 %v1180, %v1228
    %1230 = vmatmul.bf16.gmra.mxu0 %v897
    %v1231 = vpop.f32.mrf.mxu0
    %v1232 = vadd.f32 %v1183, %v1231
    %v1233 = vpop.f32.mrf.mxu0
    %v1234 = vadd.f32 %v1185, %v1233
    %1235 = vmatmul.bf16.gmra.mxu0 %v898
    %v1236 = vpop.f32.mrf.mxu0
    %v1237 = vadd.f32 %v1188, %v1236
    %v1238 = vpop.f32.mrf.mxu0
    %v1239 = vadd.f32 %v1190, %v1238
    %1240 = vmatmul.bf16.gmra.mxu0 %v899
    %v1241 = vpop.f32.mrf.mxu0
    %v1242 = vadd.f32 %v1193, %v1241
    %v1243 = vpop.f32.mrf.mxu0
    %v1244 = vadd.f32 %v1195, %v1243
    %1245 = vdwg.mxu0
    %1246 = vmatpush.bf16.msra.mxu0 %v1123
    %1247 = vmatpush.bf16.msra.mxu0 %v1122
    %1248 = vmatpush.bf16.msra.mxu0 %v1121
    %1249 = vmatpush.bf16.msra.mxu0 %v1120
    %1250 = vmatpush.bf16.msra.mxu0 %v1119
    %1251 = vmatpush.bf16.msra.mxu0 %v1118
    %1252 = vmatpush.bf16.msra.mxu0 %v1117
    %1253 = vmatpush.bf16.msra.mxu0 %v1116
    %1254 = vmatmul.bf16.gmra.mxu0 %v940
    %v1255 = vpop.f32.mrf.mxu0
    %v1256 = vadd.f32 %v1207, %v1255
    %v1257 = vpop.f32.mrf.mxu0
    %v1258 = vadd.f32 %v1209, %v1257
    %1259 = vmatmul.bf16.gmra.mxu0 %v941
    %v1260 = vpop.f32.mrf.mxu0
    %v1261 = vadd.f32 %v1212, %v1260
    %v1262 = vpop.f32.mrf.mxu0
    %v1263 = vadd.f32 %v1214, %v1262
    %1264 = vmatmul.bf16.gmra.mxu0 %v942
    %v1265 = vpop.f32.mrf.mxu0
    %v1266 = vadd.f32 %v1217, %v1265
    %v1267 = vpop.f32.mrf.mxu0
    %v1268 = vadd.f32 %v1219, %v1267
    %1269 = vmatmul.bf16.gmra.mxu0 %v943
    %v1270 = vpop.f32.mrf.mxu0
    %v1271 = vadd.f32 %v1222, %v1270
    %v1272 = vpop.f32.mrf.mxu0
    %v1273 = vadd.f32 %v1224, %v1272
    %1274 = vmatmul.bf16.gmra.mxu0 %v944
    %v1275 = vpop.f32.mrf.mxu0
    %v1276 = vadd.f32 %v1227, %v1275
    %v1277 = vpop.f32.mrf.mxu0
    %v1278 = vadd.f32 %v1229, %v1277
    %1279 = vmatmul.bf16.gmra.mxu0 %v945
    %v1280 = vpop.f32.mrf.mxu0
    %v1281 = vadd.f32 %v1232, %v1280
    %v1282 = vpop.f32.mrf.mxu0
    %v1283 = vadd.f32 %v1234, %v1282
    %1284 = vmatmul.bf16.gmra.mxu0 %v946
    %v1285 = vpop.f32.mrf.mxu0
    %v1286 = vadd.f32 %v1237, %v1285
    %v1287 = vpop.f32.mrf.mxu0
    %v1288 = vadd.f32 %v1239, %v1287
    %1289 = vmatmul.bf16.gmra.mxu0 %v947
    %v1290 = vpop.f32.mrf.mxu0
    %v1291 = vadd.f32 %v1242, %v1290
    %v1292 = vpop.f32.mrf.mxu0
    %v1293 = vadd.f32 %v1244, %v1292
    %1294 = vdwg.mxu0
    %v1295 = vld [vmem:[%s4] sm:$0x1]
    %v1297 = vperm.slane %v1295, 0
    %v1299 = vadd.f32 %v1256, %v1297
    %v1300 = vadd.f32 %v1258, %v1297
    %v1301 = vadd.f32 %v1261, %v1297
    %v1302 = vadd.f32 %v1263, %v1297
    %v1303 = vadd.f32 %v1266, %v1297
    %v1304 = vadd.f32 %v1268, %v1297
    %v1305 = vadd.f32 %v1271, %v1297
    %v1306 = vadd.f32 %v1273, %v1297
    %v1307 = vadd.f32 %v1276, %v1297
    %v1308 = vadd.f32 %v1278, %v1297
    %v1309 = vadd.f32 %v1281, %v1297
    %v1310 = vadd.f32 %v1283, %v1297
    %v1311 = vadd.f32 %v1286, %v1297
    %v1312 = vadd.f32 %v1288, %v1297
    %v1313 = vadd.f32 %v1291, %v1297
    %v1314 = vadd.f32 %v1293, %v1297
    %v1315 = vmax.f32 %v1299, 0.0
    %v1316 = vmax.f32 %v1300, 0.0
    %v1317 = vmax.f32 %v1301, 0.0
    %v1318 = vmax.f32 %v1302, 0.0
    %v1319 = vmax.f32 %v1303, 0.0
    %v1320 = vmax.f32 %v1304, 0.0
    %v1321 = vmax.f32 %v1305, 0.0
    %v1322 = vmax.f32 %v1306, 0.0
    %v1323 = vmax.f32 %v1307, 0.0
    %v1324 = vmax.f32 %v1308, 0.0
    %v1325 = vmax.f32 %v1309, 0.0
    %v1326 = vmax.f32 %v1310, 0.0
    %v1327 = vmax.f32 %v1311, 0.0
    %v1328 = vmax.f32 %v1312, 0.0
    %v1329 = vmax.f32 %v1313, 0.0
    %v1330 = vmax.f32 %v1314, 0.0
    %v1331 = vmax.f32 %v1315, %v1319
    %v1332 = vmax.f32 %v1317, %v1321
    %v1333 = vmax.f32 %v1331, %v1323
    %v1334 = vmax.f32 %v1332, %v1325
    %v1335 = vmax.f32 %v1333, %v1327
    %v1336 = vmax.f32 %v1334, %v1329
    %v1337 = vmax.f32 %v1335, %v1336
    %v1338 = vmax.f32 %v1316, %v1320
    %v1339 = vmax.f32 %v1318, %v1322
    %v1340 = vmax.f32 %v1338, %v1324
    %v1341 = vmax.f32 %v1339, %v1326
    %v1342 = vmax.f32 %v1340, %v1328
    %v1343 = vmax.f32 %v1341, %v1330
    %v1344 = vmax.f32 %v1342, %v1343
    %v1345 = vpack.c.bf16 %v1315, %v1315
    %v1346 = vpack.c.bf16 %v1316, %v1316
    %v1347 = vpack.c.bf16 %v1317, %v1317
    %v1348 = vpack.c.bf16 %v1318, %v1318
    %v1349 = vpack.c.bf16 %v1319, %v1319
    %v1350 = vpack.c.bf16 %v1320, %v1320
    %v1351 = vpack.c.bf16 %v1321, %v1321
    %v1352 = vpack.c.bf16 %v1322, %v1322
    %v1353 = vpack.c.bf16 %v1323, %v1323
    %v1354 = vpack.c.bf16 %v1324, %v1324
    %v1355 = vpack.c.bf16 %v1325, %v1325
    %v1356 = vpack.c.bf16 %v1326, %v1326
    %v1357 = vpack.c.bf16 %v1327, %v1327
    %v1358 = vpack.c.bf16 %v1328, %v1328
    %v1359 = vpack.c.bf16 %v1329, %v1329
    %v1360 = vpack.c.bf16 %v1330, %v1330
    %1361 = vst [vmem:[%s133] sm:$0xf] %v1345
    %1362 = vst [vmem:[%s133 + $0x4] sm:$0xf] %v1346
    %1363 = vst [vmem:[%s133 + $0x8] sm:$0xf] %v1347
    %1364 = vst [vmem:[%s133 + $0xc] sm:$0xf] %v1348
    %1365 = vst [vmem:[%s133 + $0x10] sm:$0xf] %v1349
    %1366 = vst [vmem:[%s133 + $0x14] sm:$0xf] %v1350
    %1367 = vst [vmem:[%s133 + $0x18] sm:$0xf] %v1351
    %1368 = vst [vmem:[%s133 + $0x1c] sm:$0xf] %v1352
    %1369 = vst [vmem:[%s133 + $0x20] sm:$0xf] %v1353
    %1370 = vst [vmem:[%s133 + $0x24] sm:$0xf] %v1354
    %1371 = vst [vmem:[%s133 + $0x28] sm:$0xf] %v1355
    %1372 = vst [vmem:[%s133 + $0x2c] sm:$0xf] %v1356
    %1373 = vst [vmem:[%s133 + $0x30] sm:$0xf] %v1357
    %1374 = vst [vmem:[%s133 + $0x34] sm:$0xf] %v1358
    %1375 = vst [vmem:[%s133 + $0x38] sm:$0xf] %v1359
    %1376 = vst [vmem:[%s133 + $0x3c] sm:$0xf] %v1360
    %v1377 = vld [vmem:[#allocation2] sm:$0xf]
    %v1378 = vld [vmem:[#allocation2 + $0x4] sm:$0xf]
    %v1379 = vld [vmem:[#allocation2 + $0x8] sm:$0xf]
    %v1380 = vld [vmem:[#allocation2 + $0xc] sm:$0xf]
    %v1381 = vld [vmem:[#allocation2 + $0x10] sm:$0xf]
    %v1382 = vld [vmem:[#allocation2 + $0x14] sm:$0xf]
    %v1383 = vld [vmem:[#allocation2 + $0x18] sm:$0xf]
    %v1384 = vld [vmem:[#allocation2 + $0x1c] sm:$0xf]
    %v1385 = vld [vmem:[#allocation2 + $0x20] sm:$0xf]
    %v1386 = vld [vmem:[#allocation2 + $0x24] sm:$0xf]
    %v1387 = vld [vmem:[#allocation2 + $0x28] sm:$0xf]
    %v1388 = vld [vmem:[#allocation2 + $0x2c] sm:$0xf]
    %v1389 = vld [vmem:[#allocation2 + $0x30] sm:$0xf]
    %v1390 = vld [vmem:[#allocation2 + $0x34] sm:$0xf]
    %v1391 = vld [vmem:[#allocation2 + $0x38] sm:$0xf]
    %v1392 = vld [vmem:[#allocation2 + $0x3c] sm:$0xf]
    %v1393 = vld [vmem:[%s133] sm:$0xf]
    %v1394 = vld [vmem:[%s133 + $0x4] sm:$0xf]
    %v1395 = vld [vmem:[%s133 + $0x8] sm:$0xf]
    %v1396 = vld [vmem:[%s133 + $0xc] sm:$0xf]
    %v1397 = vld [vmem:[%s133 + $0x10] sm:$0xf]
    %v1398 = vld [vmem:[%s133 + $0x14] sm:$0xf]
    %v1399 = vld [vmem:[%s133 + $0x18] sm:$0xf]
    %v1400 = vld [vmem:[%s133 + $0x1c] sm:$0xf]
    %v1401 = vld [vmem:[%s133 + $0x20] sm:$0xf]
    %v1402 = vld [vmem:[%s133 + $0x24] sm:$0xf]
    %v1403 = vld [vmem:[%s133 + $0x28] sm:$0xf]
    %v1404 = vld [vmem:[%s133 + $0x2c] sm:$0xf]
    %v1405 = vld [vmem:[%s133 + $0x30] sm:$0xf]
    %v1406 = vld [vmem:[%s133 + $0x34] sm:$0xf]
    %v1407 = vld [vmem:[%s133 + $0x38] sm:$0xf]
    %v1408 = vld [vmem:[%s133 + $0x3c] sm:$0xf]
    %v1409 = vld [vmem:[%s182] sm:$0xf]
    %v1410 = vld [vmem:[%s182 + $0x4] sm:$0xf]
    %v1411 = vld [vmem:[%s182 + $0x8] sm:$0xf]
    %v1412 = vld [vmem:[%s182 + $0xc] sm:$0xf]
    %v1413 = vld [vmem:[%s182 + $0x10] sm:$0xf]
    %v1414 = vld [vmem:[%s182 + $0x14] sm:$0xf]
    %v1415 = vld [vmem:[%s182 + $0x18] sm:$0xf]
    %v1416 = vld [vmem:[%s182 + $0x1c] sm:$0xf]
    %v1417 = vld [vmem:[%s182 + $0x20] sm:$0xf]
    %v1418 = vld [vmem:[%s182 + $0x24] sm:$0xf]
    %v1419 = vld [vmem:[%s182 + $0x28] sm:$0xf]
    %v1420 = vld [vmem:[%s182 + $0x2c] sm:$0xf]
    %v1421 = vld [vmem:[%s182 + $0x30] sm:$0xf]
    %v1422 = vld [vmem:[%s182 + $0x34] sm:$0xf]
    %v1423 = vld [vmem:[%s182 + $0x38] sm:$0xf]
    %v1424 = vld [vmem:[%s182 + $0x3c] sm:$0xf]
    %v1441 = vunpack.c.l.b16 %v1377
    %v1442 = vunpack.c.l.b16 %v1378
    %v1443 = vunpack.c.l.b16 %v1379
    %v1444 = vunpack.c.l.b16 %v1380
    %v1445 = vunpack.c.l.b16 %v1381
    %v1446 = vunpack.c.l.b16 %v1382
    %v1447 = vunpack.c.l.b16 %v1383
    %v1448 = vunpack.c.l.b16 %v1384
    %v1449 = vunpack.c.l.b16 %v1385
    %v1450 = vunpack.c.l.b16 %v1386
    %v1451 = vunpack.c.l.b16 %v1387
    %v1452 = vunpack.c.l.b16 %v1388
    %v1453 = vunpack.c.l.b16 %v1389
    %v1454 = vunpack.c.l.b16 %v1390
    %v1455 = vunpack.c.l.b16 %v1391
    %v1456 = vunpack.c.l.b16 %v1392
    %v1457 = vpack.c.b16 %v1442, %v1441
    %v1458 = vpack.c.b16 %v1444, %v1443
    %v1459 = vpack.c.b16 %v1446, %v1445
    %v1460 = vpack.c.b16 %v1448, %v1447
    %v1461 = vpack.c.b16 %v1450, %v1449
    %v1462 = vpack.c.b16 %v1452, %v1451
    %v1463 = vpack.c.b16 %v1454, %v1453
    %v1464 = vpack.c.b16 %v1456, %v1455
    %v1489 = vunpack.c.l.b16 %v1393
    %v1490 = vunpack.c.l.b16 %v1394
    %v1491 = vunpack.c.l.b16 %v1395
    %v1492 = vunpack.c.l.b16 %v1396
    %v1493 = vunpack.c.l.b16 %v1397
    %v1494 = vunpack.c.l.b16 %v1398
    %v1495 = vunpack.c.l.b16 %v1399
    %v1496 = vunpack.c.l.b16 %v1400
    %v1497 = vunpack.c.l.b16 %v1401
    %v1498 = vunpack.c.l.b16 %v1402
    %v1499 = vunpack.c.l.b16 %v1403
    %v1500 = vunpack.c.l.b16 %v1404
    %v1501 = vunpack.c.l.b16 %v1405
    %v1502 = vunpack.c.l.b16 %v1406
    %v1503 = vunpack.c.l.b16 %v1407
    %v1504 = vunpack.c.l.b16 %v1408
    %v1505 = vpack.c.b16 %v1490, %v1489
    %v1506 = vpack.c.b16 %v1492, %v1491
    %v1507 = vpack.c.b16 %v1494, %v1493
    %v1508 = vpack.c.b16 %v1496, %v1495
    %v1509 = vpack.c.b16 %v1498, %v1497
    %v1510 = vpack.c.b16 %v1500, %v1499
    %v1511 = vpack.c.b16 %v1502, %v1501
    %v1512 = vpack.c.b16 %v1504, %v1503
    %v1537 = vunpack.c.l.b16 %v1409
    %v1538 = vunpack.c.l.b16 %v1410
    %v1539 = vunpack.c.l.b16 %v1411
    %v1540 = vunpack.c.l.b16 %v1412
    %v1541 = vunpack.c.l.b16 %v1413
    %v1542 = vunpack.c.l.b16 %v1414
    %v1543 = vunpack.c.l.b16 %v1415
    %v1544 = vunpack.c.l.b16 %v1416
    %v1545 = vunpack.c.l.b16 %v1417
    %v1546 = vunpack.c.l.b16 %v1418
    %v1547 = vunpack.c.l.b16 %v1419
    %v1548 = vunpack.c.l.b16 %v1420
    %v1549 = vunpack.c.l.b16 %v1421
    %v1550 = vunpack.c.l.b16 %v1422
    %v1551 = vunpack.c.l.b16 %v1423
    %v1552 = vunpack.c.l.b16 %v1424
    %v1553 = vpack.c.b16 %v1538, %v1537
    %v1554 = vpack.c.b16 %v1540, %v1539
    %v1555 = vpack.c.b16 %v1542, %v1541
    %v1556 = vpack.c.b16 %v1544, %v1543
    %v1557 = vpack.c.b16 %v1546, %v1545
    %v1558 = vpack.c.b16 %v1548, %v1547
    %v1559 = vpack.c.b16 %v1550, %v1549
    %v1560 = vpack.c.b16 %v1552, %v1551
    %v1569 = vld [vmem:[#allocation9] sm:$0xf]
    %v1570 = vld [vmem:[#allocation9 + $0x4] sm:$0xf]
    %v1571 = vld [vmem:[#allocation9 + $0x8] sm:$0xf]
    %v1572 = vld [vmem:[#allocation9 + $0xc] sm:$0xf]
    %v1573 = vld [vmem:[#allocation9 + $0x10] sm:$0xf]
    %v1574 = vld [vmem:[#allocation9 + $0x14] sm:$0xf]
    %v1575 = vld [vmem:[#allocation9 + $0x18] sm:$0xf]
    %v1576 = vld [vmem:[#allocation9 + $0x1c] sm:$0xf]
    %v1577 = vld [vmem:[#allocation9 + $0x20] sm:$0xf]
    %v1578 = vld [vmem:[#allocation9 + $0x24] sm:$0xf]
    %v1579 = vld [vmem:[#allocation9 + $0x28] sm:$0xf]
    %v1580 = vld [vmem:[#allocation9 + $0x2c] sm:$0xf]
    %v1581 = vld [vmem:[#allocation9 + $0x30] sm:$0xf]
    %v1582 = vld [vmem:[#allocation9 + $0x34] sm:$0xf]
    %v1583 = vld [vmem:[#allocation9 + $0x38] sm:$0xf]
    %v1584 = vld [vmem:[#allocation9 + $0x3c] sm:$0xf]
    %v1585 = vld [vmem:[#allocation9 + $0x40] sm:$0xf]
    %v1586 = vld [vmem:[#allocation9 + $0x44] sm:$0xf]
    %v1587 = vld [vmem:[#allocation9 + $0x48] sm:$0xf]
    %v1588 = vld [vmem:[#allocation9 + $0x4c] sm:$0xf]
    %v1589 = vld [vmem:[#allocation9 + $0x50] sm:$0xf]
    %v1590 = vld [vmem:[#allocation9 + $0x54] sm:$0xf]
    %v1591 = vld [vmem:[#allocation9 + $0x58] sm:$0xf]
    %v1592 = vld [vmem:[#allocation9 + $0x5c] sm:$0xf]
    %v1593 = vld [vmem:[#allocation9 + $0x60] sm:$0xf]
    %v1594 = vld [vmem:[#allocation9 + $0x64] sm:$0xf]
    %v1595 = vld [vmem:[#allocation9 + $0x68] sm:$0xf]
    %v1596 = vld [vmem:[#allocation9 + $0x6c] sm:$0xf]
    %v1597 = vld [vmem:[#allocation9 + $0x70] sm:$0xf]
    %v1598 = vld [vmem:[#allocation9 + $0x74] sm:$0xf]
    %v1599 = vld [vmem:[#allocation9 + $0x78] sm:$0xf]
    %v1600 = vld [vmem:[#allocation9 + $0x7c] sm:$0xf]
    %v1601 = vld [vmem:[#allocation9 + $0x80] sm:$0xf]
    %v1602 = vld [vmem:[#allocation9 + $0x84] sm:$0xf]
    %v1603 = vld [vmem:[#allocation9 + $0x88] sm:$0xf]
    %v1604 = vld [vmem:[#allocation9 + $0x8c] sm:$0xf]
    %v1605 = vld [vmem:[#allocation9 + $0x90] sm:$0xf]
    %v1606 = vld [vmem:[#allocation9 + $0x94] sm:$0xf]
    %v1607 = vld [vmem:[#allocation9 + $0x98] sm:$0xf]
    %v1608 = vld [vmem:[#allocation9 + $0x9c] sm:$0xf]
    %v1609 = vld [vmem:[#allocation9 + $0xa0] sm:$0xf]
    %v1610 = vld [vmem:[#allocation9 + $0xa4] sm:$0xf]
    %v1611 = vld [vmem:[#allocation9 + $0xa8] sm:$0xf]
    %v1612 = vld [vmem:[#allocation9 + $0xac] sm:$0xf]
    %v1613 = vld [vmem:[#allocation9 + $0xb0] sm:$0xf]
    %v1614 = vld [vmem:[#allocation9 + $0xb4] sm:$0xf]
    %v1615 = vld [vmem:[#allocation9 + $0xb8] sm:$0xf]
    %v1616 = vld [vmem:[#allocation9 + $0xbc] sm:$0xf]
    %v1665 = vunpack.c.l.b16 %v1569
    %v1666 = vunpack.c.l.b16 %v1570
    %v1667 = vunpack.c.l.b16 %v1571
    %v1668 = vunpack.c.l.b16 %v1572
    %v1669 = vunpack.c.l.b16 %v1573
    %v1670 = vunpack.c.l.b16 %v1574
    %v1671 = vunpack.c.l.b16 %v1575
    %v1672 = vunpack.c.l.b16 %v1576
    %v1673 = vunpack.c.l.b16 %v1577
    %v1674 = vunpack.c.l.b16 %v1578
    %v1675 = vunpack.c.l.b16 %v1579
    %v1676 = vunpack.c.l.b16 %v1580
    %v1677 = vunpack.c.l.b16 %v1581
    %v1678 = vunpack.c.l.b16 %v1582
    %v1679 = vunpack.c.l.b16 %v1583
    %v1680 = vunpack.c.l.b16 %v1584
    %v1681 = vunpack.c.l.b16 %v1585
    %v1682 = vunpack.c.l.b16 %v1586
    %v1683 = vunpack.c.l.b16 %v1587
    %v1684 = vunpack.c.l.b16 %v1588
    %v1685 = vunpack.c.l.b16 %v1589
    %v1686 = vunpack.c.l.b16 %v1590
    %v1687 = vunpack.c.l.b16 %v1591
    %v1688 = vunpack.c.l.b16 %v1592
    %v1689 = vunpack.c.l.b16 %v1593
    %v1690 = vunpack.c.l.b16 %v1594
    %v1691 = vunpack.c.l.b16 %v1595
    %v1692 = vunpack.c.l.b16 %v1596
    %v1693 = vunpack.c.l.b16 %v1597
    %v1694 = vunpack.c.l.b16 %v1598
    %v1695 = vunpack.c.l.b16 %v1599
    %v1696 = vunpack.c.l.b16 %v1600
    %v1697 = vunpack.c.l.b16 %v1601
    %v1698 = vunpack.c.l.b16 %v1602
    %v1699 = vunpack.c.l.b16 %v1603
    %v1700 = vunpack.c.l.b16 %v1604
    %v1701 = vunpack.c.l.b16 %v1605
    %v1702 = vunpack.c.l.b16 %v1606
    %v1703 = vunpack.c.l.b16 %v1607
    %v1704 = vunpack.c.l.b16 %v1608
    %v1705 = vunpack.c.l.b16 %v1609
    %v1706 = vunpack.c.l.b16 %v1610
    %v1707 = vunpack.c.l.b16 %v1611
    %v1708 = vunpack.c.l.b16 %v1612
    %v1709 = vunpack.c.l.b16 %v1613
    %v1710 = vunpack.c.l.b16 %v1614
    %v1711 = vunpack.c.l.b16 %v1615
    %v1712 = vunpack.c.l.b16 %v1616
    %v1713 = vpack.c.b16 %v1666, %v1665
    %v1714 = vpack.c.b16 %v1668, %v1667
    %v1715 = vpack.c.b16 %v1670, %v1669
    %v1716 = vpack.c.b16 %v1672, %v1671
    %v1717 = vpack.c.b16 %v1674, %v1673
    %v1718 = vpack.c.b16 %v1676, %v1675
    %v1719 = vpack.c.b16 %v1678, %v1677
    %v1720 = vpack.c.b16 %v1680, %v1679
    %v1721 = vpack.c.b16 %v1682, %v1681
    %v1722 = vpack.c.b16 %v1684, %v1683
    %v1723 = vpack.c.b16 %v1686, %v1685
    %v1724 = vpack.c.b16 %v1688, %v1687
    %v1725 = vpack.c.b16 %v1690, %v1689
    %v1726 = vpack.c.b16 %v1692, %v1691
    %v1727 = vpack.c.b16 %v1694, %v1693
    %v1728 = vpack.c.b16 %v1696, %v1695
    %v1729 = vpack.c.b16 %v1698, %v1697
    %v1730 = vpack.c.b16 %v1700, %v1699
    %v1731 = vpack.c.b16 %v1702, %v1701
    %v1732 = vpack.c.b16 %v1704, %v1703
    %v1733 = vpack.c.b16 %v1706, %v1705
    %v1734 = vpack.c.b16 %v1708, %v1707
    %v1735 = vpack.c.b16 %v1710, %v1709
    %v1736 = vpack.c.b16 %v1712, %v1711
    %1761 = vmatpush.bf16.msra.mxu0 %v1720
    %1762 = vmatpush.bf16.msra.mxu0 %v1719
    %1763 = vmatpush.bf16.msra.mxu0 %v1718
    %1764 = vmatpush.bf16.msra.mxu0 %v1717
    %1765 = vmatpush.bf16.msra.mxu0 %v1716
    %1766 = vmatpush.bf16.msra.mxu0 %v1715
    %1767 = vmatpush.bf16.msra.mxu0 %v1714
    %1768 = vmatpush.bf16.msra.mxu0 %v1713
    %1769 = vmatmul.bf16.gmra.mxu0 %v1457
    %v1770 = vpop.f32.mrf.mxu0
    %v1771 = vadd.f32 0.0, %v1770
    %v1772 = vpop.f32.mrf.mxu0
    %v1773 = vadd.f32 0.0, %v1772
    %1774 = vmatmul.bf16.gmra.mxu0 %v1458
    %v1775 = vpop.f32.mrf.mxu0
    %v1776 = vadd.f32 0.0, %v1775
    %v1777 = vpop.f32.mrf.mxu0
    %v1778 = vadd.f32 0.0, %v1777
    %1779 = vmatmul.bf16.gmra.mxu0 %v1459
    %v1780 = vpop.f32.mrf.mxu0
    %v1781 = vadd.f32 0.0, %v1780
    %v1782 = vpop.f32.mrf.mxu0
    %v1783 = vadd.f32 0.0, %v1782
    %1784 = vmatmul.bf16.gmra.mxu0 %v1460
    %v1785 = vpop.f32.mrf.mxu0
    %v1786 = vadd.f32 0.0, %v1785
    %v1787 = vpop.f32.mrf.mxu0
    %v1788 = vadd.f32 0.0, %v1787
    %1789 = vmatmul.bf16.gmra.mxu0 %v1461
    %v1790 = vpop.f32.mrf.mxu0
    %v1791 = vadd.f32 0.0, %v1790
    %v1792 = vpop.f32.mrf.mxu0
    %v1793 = vadd.f32 0.0, %v1792
    %1794 = vmatmul.bf16.gmra.mxu0 %v1462
    %v1795 = vpop.f32.mrf.mxu0
    %v1796 = vadd.f32 0.0, %v1795
    %v1797 = vpop.f32.mrf.mxu0
    %v1798 = vadd.f32 0.0, %v1797
    %1799 = vmatmul.bf16.gmra.mxu0 %v1463
    %v1800 = vpop.f32.mrf.mxu0
    %v1801 = vadd.f32 0.0, %v1800
    %v1802 = vpop.f32.mrf.mxu0
    %v1803 = vadd.f32 0.0, %v1802
    %1804 = vmatmul.bf16.gmra.mxu0 %v1464
    %v1805 = vpop.f32.mrf.mxu0
    %v1806 = vadd.f32 0.0, %v1805
    %v1807 = vpop.f32.mrf.mxu0
    %v1808 = vadd.f32 0.0, %v1807
    %1809 = vdwg.mxu0
    %1810 = vmatpush.bf16.msra.mxu0 %v1728
    %1811 = vmatpush.bf16.msra.mxu0 %v1727
    %1812 = vmatpush.bf16.msra.mxu0 %v1726
    %1813 = vmatpush.bf16.msra.mxu0 %v1725
    %1814 = vmatpush.bf16.msra.mxu0 %v1724
    %1815 = vmatpush.bf16.msra.mxu0 %v1723
    %1816 = vmatpush.bf16.msra.mxu0 %v1722
    %1817 = vmatpush.bf16.msra.mxu0 %v1721
    %1818 = vmatmul.bf16.gmra.mxu0 %v1505
    %v1819 = vpop.f32.mrf.mxu0
    %v1820 = vadd.f32 %v1771, %v1819
    %v1821 = vpop.f32.mrf.mxu0
    %v1822 = vadd.f32 %v1773, %v1821
    %1823 = vmatmul.bf16.gmra.mxu0 %v1506
    %v1824 = vpop.f32.mrf.mxu0
    %v1825 = vadd.f32 %v1776, %v1824
    %v1826 = vpop.f32.mrf.mxu0
    %v1827 = vadd.f32 %v1778, %v1826
    %1828 = vmatmul.bf16.gmra.mxu0 %v1507
    %v1829 = vpop.f32.mrf.mxu0
    %v1830 = vadd.f32 %v1781, %v1829
    %v1831 = vpop.f32.mrf.mxu0
    %v1832 = vadd.f32 %v1783, %v1831
    %1833 = vmatmul.bf16.gmra.mxu0 %v1508
    %v1834 = vpop.f32.mrf.mxu0
    %v1835 = vadd.f32 %v1786, %v1834
    %v1836 = vpop.f32.mrf.mxu0
    %v1837 = vadd.f32 %v1788, %v1836
    %1838 = vmatmul.bf16.gmra.mxu0 %v1509
    %v1839 = vpop.f32.mrf.mxu0
    %v1840 = vadd.f32 %v1791, %v1839
    %v1841 = vpop.f32.mrf.mxu0
    %v1842 = vadd.f32 %v1793, %v1841
    %1843 = vmatmul.bf16.gmra.mxu0 %v1510
    %v1844 = vpop.f32.mrf.mxu0
    %v1845 = vadd.f32 %v1796, %v1844
    %v1846 = vpop.f32.mrf.mxu0
    %v1847 = vadd.f32 %v1798, %v1846
    %1848 = vmatmul.bf16.gmra.mxu0 %v1511
    %v1849 = vpop.f32.mrf.mxu0
    %v1850 = vadd.f32 %v1801, %v1849
    %v1851 = vpop.f32.mrf.mxu0
    %v1852 = vadd.f32 %v1803, %v1851
    %1853 = vmatmul.bf16.gmra.mxu0 %v1512
    %v1854 = vpop.f32.mrf.mxu0
    %v1855 = vadd.f32 %v1806, %v1854
    %v1856 = vpop.f32.mrf.mxu0
    %v1857 = vadd.f32 %v1808, %v1856
    %1858 = vdwg.mxu0
    %1859 = vmatpush.bf16.msra.mxu0 %v1736
    %1860 = vmatpush.bf16.msra.mxu0 %v1735
    %1861 = vmatpush.bf16.msra.mxu0 %v1734
    %1862 = vmatpush.bf16.msra.mxu0 %v1733
    %1863 = vmatpush.bf16.msra.mxu0 %v1732
    %1864 = vmatpush.bf16.msra.mxu0 %v1731
    %1865 = vmatpush.bf16.msra.mxu0 %v1730
    %1866 = vmatpush.bf16.msra.mxu0 %v1729
    %1867 = vmatmul.bf16.gmra.mxu0 %v1553
    %v1868 = vpop.f32.mrf.mxu0
    %v1869 = vadd.f32 %v1820, %v1868
    %v1870 = vpop.f32.mrf.mxu0
    %v1871 = vadd.f32 %v1822, %v1870
    %1872 = vmatmul.bf16.gmra.mxu0 %v1554
    %v1873 = vpop.f32.mrf.mxu0
    %v1874 = vadd.f32 %v1825, %v1873
    %v1875 = vpop.f32.mrf.mxu0
    %v1876 = vadd.f32 %v1827, %v1875
    %1877 = vmatmul.bf16.gmra.mxu0 %v1555
    %v1878 = vpop.f32.mrf.mxu0
    %v1879 = vadd.f32 %v1830, %v1878
    %v1880 = vpop.f32.mrf.mxu0
    %v1881 = vadd.f32 %v1832, %v1880
    %1882 = vmatmul.bf16.gmra.mxu0 %v1556
    %v1883 = vpop.f32.mrf.mxu0
    %v1884 = vadd.f32 %v1835, %v1883
    %v1885 = vpop.f32.mrf.mxu0
    %v1886 = vadd.f32 %v1837, %v1885
    %1887 = vmatmul.bf16.gmra.mxu0 %v1557
    %v1888 = vpop.f32.mrf.mxu0
    %v1889 = vadd.f32 %v1840, %v1888
    %v1890 = vpop.f32.mrf.mxu0
    %v1891 = vadd.f32 %v1842, %v1890
    %1892 = vmatmul.bf16.gmra.mxu0 %v1558
    %v1893 = vpop.f32.mrf.mxu0
    %v1894 = vadd.f32 %v1845, %v1893
    %v1895 = vpop.f32.mrf.mxu0
    %v1896 = vadd.f32 %v1847, %v1895
    %1897 = vmatmul.bf16.gmra.mxu0 %v1559
    %v1898 = vpop.f32.mrf.mxu0
    %v1899 = vadd.f32 %v1850, %v1898
    %v1900 = vpop.f32.mrf.mxu0
    %v1901 = vadd.f32 %v1852, %v1900
    %1902 = vmatmul.bf16.gmra.mxu0 %v1560
    %v1903 = vpop.f32.mrf.mxu0
    %v1904 = vadd.f32 %v1855, %v1903
    %v1905 = vpop.f32.mrf.mxu0
    %v1906 = vadd.f32 %v1857, %v1905
    %1907 = vdwg.mxu0
    %v1908 = vld [vmem:[%s6] sm:$0x1]
    %v1910 = vperm.slane %v1908, 0
    %v1912 = vadd.f32 %v1869, %v1910
    %v1913 = vadd.f32 %v1871, %v1910
    %v1914 = vadd.f32 %v1874, %v1910
    %v1915 = vadd.f32 %v1876, %v1910
    %v1916 = vadd.f32 %v1879, %v1910
    %v1917 = vadd.f32 %v1881, %v1910
    %v1918 = vadd.f32 %v1884, %v1910
    %v1919 = vadd.f32 %v1886, %v1910
    %v1920 = vadd.f32 %v1889, %v1910
    %v1921 = vadd.f32 %v1891, %v1910
    %v1922 = vadd.f32 %v1894, %v1910
    %v1923 = vadd.f32 %v1896, %v1910
    %v1924 = vadd.f32 %v1899, %v1910
    %v1925 = vadd.f32 %v1901, %v1910
    %v1926 = vadd.f32 %v1904, %v1910
    %v1927 = vadd.f32 %v1906, %v1910
    %v1928 = vmax.f32 %v1912, 0.0
    %v1929 = vmax.f32 %v1913, 0.0
    %v1930 = vmax.f32 %v1914, 0.0
    %v1931 = vmax.f32 %v1915, 0.0
    %v1932 = vmax.f32 %v1916, 0.0
    %v1933 = vmax.f32 %v1917, 0.0
    %v1934 = vmax.f32 %v1918, 0.0
    %v1935 = vmax.f32 %v1919, 0.0
    %v1936 = vmax.f32 %v1920, 0.0
    %v1937 = vmax.f32 %v1921, 0.0
    %v1938 = vmax.f32 %v1922, 0.0
    %v1939 = vmax.f32 %v1923, 0.0
    %v1940 = vmax.f32 %v1924, 0.0
    %v1941 = vmax.f32 %v1925, 0.0
    %v1942 = vmax.f32 %v1926, 0.0
    %v1943 = vmax.f32 %v1927, 0.0
    %v1944 = vmax.f32 %v1928, %v1932
    %v1945 = vmax.f32 %v1930, %v1934
    %v1946 = vmax.f32 %v1944, %v1936
    %v1947 = vmax.f32 %v1945, %v1938
    %v1948 = vmax.f32 %v1946, %v1940
    %v1949 = vmax.f32 %v1947, %v1942
    %v1950 = vmax.f32 %v1948, %v1949
    %v1951 = vmax.f32 %v1929, %v1933
    %v1952 = vmax.f32 %v1931, %v1935
    %v1953 = vmax.f32 %v1951, %v1937
    %v1954 = vmax.f32 %v1952, %v1939
    %v1955 = vmax.f32 %v1953, %v1941
    %v1956 = vmax.f32 %v1954, %v1943
    %v1957 = vmax.f32 %v1955, %v1956
    %v1958 = vpack.c.bf16 %v1928, %v1928
    %v1959 = vpack.c.bf16 %v1929, %v1929
    %v1960 = vpack.c.bf16 %v1930, %v1930
    %v1961 = vpack.c.bf16 %v1931, %v1931
    %v1962 = vpack.c.bf16 %v1932, %v1932
    %v1963 = vpack.c.bf16 %v1933, %v1933
    %v1964 = vpack.c.bf16 %v1934, %v1934
    %v1965 = vpack.c.bf16 %v1935, %v1935
    %v1966 = vpack.c.bf16 %v1936, %v1936
    %v1967 = vpack.c.bf16 %v1937, %v1937
    %v1968 = vpack.c.bf16 %v1938, %v1938
    %v1969 = vpack.c.bf16 %v1939, %v1939
    %v1970 = vpack.c.bf16 %v1940, %v1940
    %v1971 = vpack.c.bf16 %v1941, %v1941
    %v1972 = vpack.c.bf16 %v1942, %v1942
    %v1973 = vpack.c.bf16 %v1943, %v1943
    %1974 = vst [vmem:[%s133] sm:$0xf] %v1958
    %1975 = vst [vmem:[%s133 + $0x4] sm:$0xf] %v1959
    %1976 = vst [vmem:[%s133 + $0x8] sm:$0xf] %v1960
    %1977 = vst [vmem:[%s133 + $0xc] sm:$0xf] %v1961
    %1978 = vst [vmem:[%s133 + $0x10] sm:$0xf] %v1962
    %1979 = vst [vmem:[%s133 + $0x14] sm:$0xf] %v1963
    %1980 = vst [vmem:[%s133 + $0x18] sm:$0xf] %v1964
    %1981 = vst [vmem:[%s133 + $0x1c] sm:$0xf] %v1965
    %1982 = vst [vmem:[%s133 + $0x20] sm:$0xf] %v1966
    %1983 = vst [vmem:[%s133 + $0x24] sm:$0xf] %v1967
    %1984 = vst [vmem:[%s133 + $0x28] sm:$0xf] %v1968
    %1985 = vst [vmem:[%s133 + $0x2c] sm:$0xf] %v1969
    %1986 = vst [vmem:[%s133 + $0x30] sm:$0xf] %v1970
    %1987 = vst [vmem:[%s133 + $0x34] sm:$0xf] %v1971
    %1988 = vst [vmem:[%s133 + $0x38] sm:$0xf] %v1972
    %1989 = vst [vmem:[%s133 + $0x3c] sm:$0xf] %v1973
    %v1990 = vld [vmem:[#allocation2] sm:$0xf]
    %v1991 = vld [vmem:[#allocation2 + $0x4] sm:$0xf]
    %v1992 = vld [vmem:[#allocation2 + $0x8] sm:$0xf]
    %v1993 = vld [vmem:[#allocation2 + $0xc] sm:$0xf]
    %v1994 = vld [vmem:[#allocation2 + $0x10] sm:$0xf]
    %v1995 = vld [vmem:[#allocation2 + $0x14] sm:$0xf]
    %v1996 = vld [vmem:[#allocation2 + $0x18] sm:$0xf]
    %v1997 = vld [vmem:[#allocation2 + $0x1c] sm:$0xf]
    %v1998 = vld [vmem:[#allocation2 + $0x20] sm:$0xf]
    %v1999 = vld [vmem:[#allocation2 + $0x24] sm:$0xf]
    %v2000 = vld [vmem:[#allocation2 + $0x28] sm:$0xf]
    %v2001 = vld [vmem:[#allocation2 + $0x2c] sm:$0xf]
    %v2002 = vld [vmem:[#allocation2 + $0x30] sm:$0xf]
    %v2003 = vld [vmem:[#allocation2 + $0x34] sm:$0xf]
    %v2004 = vld [vmem:[#allocation2 + $0x38] sm:$0xf]
    %v2005 = vld [vmem:[#allocation2 + $0x3c] sm:$0xf]
    %v2006 = vld [vmem:[%s133] sm:$0xf]
    %v2007 = vld [vmem:[%s133 + $0x4] sm:$0xf]
    %v2008 = vld [vmem:[%s133 + $0x8] sm:$0xf]
    %v2009 = vld [vmem:[%s133 + $0xc] sm:$0xf]
    %v2010 = vld [vmem:[%s133 + $0x10] sm:$0xf]
    %v2011 = vld [vmem:[%s133 + $0x14] sm:$0xf]
    %v2012 = vld [vmem:[%s133 + $0x18] sm:$0xf]
    %v2013 = vld [vmem:[%s133 + $0x1c] sm:$0xf]
    %v2014 = vld [vmem:[%s133 + $0x20] sm:$0xf]
    %v2015 = vld [vmem:[%s133 + $0x24] sm:$0xf]
    %v2016 = vld [vmem:[%s133 + $0x28] sm:$0xf]
    %v2017 = vld [vmem:[%s133 + $0x2c] sm:$0xf]
    %v2018 = vld [vmem:[%s133 + $0x30] sm:$0xf]
    %v2019 = vld [vmem:[%s133 + $0x34] sm:$0xf]
    %v2020 = vld [vmem:[%s133 + $0x38] sm:$0xf]
    %v2021 = vld [vmem:[%s133 + $0x3c] sm:$0xf]
    %v2022 = vld [vmem:[%s182] sm:$0xf]
    %v2023 = vld [vmem:[%s182 + $0x4] sm:$0xf]
    %v2024 = vld [vmem:[%s182 + $0x8] sm:$0xf]
    %v2025 = vld [vmem:[%s182 + $0xc] sm:$0xf]
    %v2026 = vld [vmem:[%s182 + $0x10] sm:$0xf]
    %v2027 = vld [vmem:[%s182 + $0x14] sm:$0xf]
    %v2028 = vld [vmem:[%s182 + $0x18] sm:$0xf]
    %v2029 = vld [vmem:[%s182 + $0x1c] sm:$0xf]
    %v2030 = vld [vmem:[%s182 + $0x20] sm:$0xf]
    %v2031 = vld [vmem:[%s182 + $0x24] sm:$0xf]
    %v2032 = vld [vmem:[%s182 + $0x28] sm:$0xf]
    %v2033 = vld [vmem:[%s182 + $0x2c] sm:$0xf]
    %v2034 = vld [vmem:[%s182 + $0x30] sm:$0xf]
    %v2035 = vld [vmem:[%s182 + $0x34] sm:$0xf]
    %v2036 = vld [vmem:[%s182 + $0x38] sm:$0xf]
    %v2037 = vld [vmem:[%s182 + $0x3c] sm:$0xf]
    %v2054 = vunpack.c.l.b16 %v1990
    %v2055 = vunpack.c.l.b16 %v1991
    %v2056 = vunpack.c.l.b16 %v1992
    %v2057 = vunpack.c.l.b16 %v1993
    %v2058 = vunpack.c.l.b16 %v1994
    %v2059 = vunpack.c.l.b16 %v1995
    %v2060 = vunpack.c.l.b16 %v1996
    %v2061 = vunpack.c.l.b16 %v1997
    %v2062 = vunpack.c.l.b16 %v1998
    %v2063 = vunpack.c.l.b16 %v1999
    %v2064 = vunpack.c.l.b16 %v2000
    %v2065 = vunpack.c.l.b16 %v2001
    %v2066 = vunpack.c.l.b16 %v2002
    %v2067 = vunpack.c.l.b16 %v2003
    %v2068 = vunpack.c.l.b16 %v2004
    %v2069 = vunpack.c.l.b16 %v2005
    %v2070 = vpack.c.b16 %v2055, %v2054
    %v2071 = vpack.c.b16 %v2057, %v2056
    %v2072 = vpack.c.b16 %v2059, %v2058
    %v2073 = vpack.c.b16 %v2061, %v2060
    %v2074 = vpack.c.b16 %v2063, %v2062
    %v2075 = vpack.c.b16 %v2065, %v2064
    %v2076 = vpack.c.b16 %v2067, %v2066
    %v2077 = vpack.c.b16 %v2069, %v2068
    %v2102 = vunpack.c.l.b16 %v2006
    %v2103 = vunpack.c.l.b16 %v2007
    %v2104 = vunpack.c.l.b16 %v2008
    %v2105 = vunpack.c.l.b16 %v2009
    %v2106 = vunpack.c.l.b16 %v2010
    %v2107 = vunpack.c.l.b16 %v2011
    %v2108 = vunpack.c.l.b16 %v2012
    %v2109 = vunpack.c.l.b16 %v2013
    %v2110 = vunpack.c.l.b16 %v2014
    %v2111 = vunpack.c.l.b16 %v2015
    %v2112 = vunpack.c.l.b16 %v2016
    %v2113 = vunpack.c.l.b16 %v2017
    %v2114 = vunpack.c.l.b16 %v2018
    %v2115 = vunpack.c.l.b16 %v2019
    %v2116 = vunpack.c.l.b16 %v2020
    %v2117 = vunpack.c.l.b16 %v2021
    %v2118 = vpack.c.b16 %v2103, %v2102
    %v2119 = vpack.c.b16 %v2105, %v2104
    %v2120 = vpack.c.b16 %v2107, %v2106
    %v2121 = vpack.c.b16 %v2109, %v2108
    %v2122 = vpack.c.b16 %v2111, %v2110
    %v2123 = vpack.c.b16 %v2113, %v2112
    %v2124 = vpack.c.b16 %v2115, %v2114
    %v2125 = vpack.c.b16 %v2117, %v2116
    %v2150 = vunpack.c.l.b16 %v2022
    %v2151 = vunpack.c.l.b16 %v2023
    %v2152 = vunpack.c.l.b16 %v2024
    %v2153 = vunpack.c.l.b16 %v2025
    %v2154 = vunpack.c.l.b16 %v2026
    %v2155 = vunpack.c.l.b16 %v2027
    %v2156 = vunpack.c.l.b16 %v2028
    %v2157 = vunpack.c.l.b16 %v2029
    %v2158 = vunpack.c.l.b16 %v2030
    %v2159 = vunpack.c.l.b16 %v2031
    %v2160 = vunpack.c.l.b16 %v2032
    %v2161 = vunpack.c.l.b16 %v2033
    %v2162 = vunpack.c.l.b16 %v2034
    %v2163 = vunpack.c.l.b16 %v2035
    %v2164 = vunpack.c.l.b16 %v2036
    %v2165 = vunpack.c.l.b16 %v2037
    %v2166 = vpack.c.b16 %v2151, %v2150
    %v2167 = vpack.c.b16 %v2153, %v2152
    %v2168 = vpack.c.b16 %v2155, %v2154
    %v2169 = vpack.c.b16 %v2157, %v2156
    %v2170 = vpack.c.b16 %v2159, %v2158
    %v2171 = vpack.c.b16 %v2161, %v2160
    %v2172 = vpack.c.b16 %v2163, %v2162
    %v2173 = vpack.c.b16 %v2165, %v2164
    %v2182 = vld [vmem:[#allocation11] sm:$0xf]
    %v2183 = vld [vmem:[#allocation11 + $0x4] sm:$0xf]
    %v2184 = vld [vmem:[#allocation11 + $0x8] sm:$0xf]
    %v2185 = vld [vmem:[#allocation11 + $0xc] sm:$0xf]
    %v2186 = vld [vmem:[#allocation11 + $0x10] sm:$0xf]
    %v2187 = vld [vmem:[#allocation11 + $0x14] sm:$0xf]
    %v2188 = vld [vmem:[#allocation11 + $0x18] sm:$0xf]
    %v2189 = vld [vmem:[#allocation11 + $0x1c] sm:$0xf]
    %v2190 = vld [vmem:[#allocation11 + $0x20] sm:$0xf]
    %v2191 = vld [vmem:[#allocation11 + $0x24] sm:$0xf]
    %v2192 = vld [vmem:[#allocation11 + $0x28] sm:$0xf]
    %v2193 = vld [vmem:[#allocation11 + $0x2c] sm:$0xf]
    %v2194 = vld [vmem:[#allocation11 + $0x30] sm:$0xf]
    %v2195 = vld [vmem:[#allocation11 + $0x34] sm:$0xf]
    %v2196 = vld [vmem:[#allocation11 + $0x38] sm:$0xf]
    %v2197 = vld [vmem:[#allocation11 + $0x3c] sm:$0xf]
    %v2198 = vld [vmem:[#allocation11 + $0x40] sm:$0xf]
    %v2199 = vld [vmem:[#allocation11 + $0x44] sm:$0xf]
    %v2200 = vld [vmem:[#allocation11 + $0x48] sm:$0xf]
    %v2201 = vld [vmem:[#allocation11 + $0x4c] sm:$0xf]
    %v2202 = vld [vmem:[#allocation11 + $0x50] sm:$0xf]
    %v2203 = vld [vmem:[#allocation11 + $0x54] sm:$0xf]
    %v2204 = vld [vmem:[#allocation11 + $0x58] sm:$0xf]
    %v2205 = vld [vmem:[#allocation11 + $0x5c] sm:$0xf]
    %v2206 = vld [vmem:[#allocation11 + $0x60] sm:$0xf]
    %v2207 = vld [vmem:[#allocation11 + $0x64] sm:$0xf]
    %v2208 = vld [vmem:[#allocation11 + $0x68] sm:$0xf]
    %v2209 = vld [vmem:[#allocation11 + $0x6c] sm:$0xf]
    %v2210 = vld [vmem:[#allocation11 + $0x70] sm:$0xf]
    %v2211 = vld [vmem:[#allocation11 + $0x74] sm:$0xf]
    %v2212 = vld [vmem:[#allocation11 + $0x78] sm:$0xf]
    %v2213 = vld [vmem:[#allocation11 + $0x7c] sm:$0xf]
    %v2214 = vld [vmem:[#allocation11 + $0x80] sm:$0xf]
    %v2215 = vld [vmem:[#allocation11 + $0x84] sm:$0xf]
    %v2216 = vld [vmem:[#allocation11 + $0x88] sm:$0xf]
    %v2217 = vld [vmem:[#allocation11 + $0x8c] sm:$0xf]
    %v2218 = vld [vmem:[#allocation11 + $0x90] sm:$0xf]
    %v2219 = vld [vmem:[#allocation11 + $0x94] sm:$0xf]
    %v2220 = vld [vmem:[#allocation11 + $0x98] sm:$0xf]
    %v2221 = vld [vmem:[#allocation11 + $0x9c] sm:$0xf]
    %v2222 = vld [vmem:[#allocation11 + $0xa0] sm:$0xf]
    %v2223 = vld [vmem:[#allocation11 + $0xa4] sm:$0xf]
    %v2224 = vld [vmem:[#allocation11 + $0xa8] sm:$0xf]
    %v2225 = vld [vmem:[#allocation11 + $0xac] sm:$0xf]
    %v2226 = vld [vmem:[#allocation11 + $0xb0] sm:$0xf]
    %v2227 = vld [vmem:[#allocation11 + $0xb4] sm:$0xf]
    %v2228 = vld [vmem:[#allocation11 + $0xb8] sm:$0xf]
    %v2229 = vld [vmem:[#allocation11 + $0xbc] sm:$0xf]
    %v2278 = vunpack.c.l.b16 %v2182
    %v2279 = vunpack.c.l.b16 %v2183
    %v2280 = vunpack.c.l.b16 %v2184
    %v2281 = vunpack.c.l.b16 %v2185
    %v2282 = vunpack.c.l.b16 %v2186
    %v2283 = vunpack.c.l.b16 %v2187
    %v2284 = vunpack.c.l.b16 %v2188
    %v2285 = vunpack.c.l.b16 %v2189
    %v2286 = vunpack.c.l.b16 %v2190
    %v2287 = vunpack.c.l.b16 %v2191
    %v2288 = vunpack.c.l.b16 %v2192
    %v2289 = vunpack.c.l.b16 %v2193
    %v2290 = vunpack.c.l.b16 %v2194
    %v2291 = vunpack.c.l.b16 %v2195
    %v2292 = vunpack.c.l.b16 %v2196
    %v2293 = vunpack.c.l.b16 %v2197
    %v2294 = vunpack.c.l.b16 %v2198
    %v2295 = vunpack.c.l.b16 %v2199
    %v2296 = vunpack.c.l.b16 %v2200
    %v2297 = vunpack.c.l.b16 %v2201
    %v2298 = vunpack.c.l.b16 %v2202
    %v2299 = vunpack.c.l.b16 %v2203
    %v2300 = vunpack.c.l.b16 %v2204
    %v2301 = vunpack.c.l.b16 %v2205
    %v2302 = vunpack.c.l.b16 %v2206
    %v2303 = vunpack.c.l.b16 %v2207
    %v2304 = vunpack.c.l.b16 %v2208
    %v2305 = vunpack.c.l.b16 %v2209
    %v2306 = vunpack.c.l.b16 %v2210
    %v2307 = vunpack.c.l.b16 %v2211
    %v2308 = vunpack.c.l.b16 %v2212
    %v2309 = vunpack.c.l.b16 %v2213
    %v2310 = vunpack.c.l.b16 %v2214
    %v2311 = vunpack.c.l.b16 %v2215
    %v2312 = vunpack.c.l.b16 %v2216
    %v2313 = vunpack.c.l.b16 %v2217
    %v2314 = vunpack.c.l.b16 %v2218
    %v2315 = vunpack.c.l.b16 %v2219
    %v2316 = vunpack.c.l.b16 %v2220
    %v2317 = vunpack.c.l.b16 %v2221
    %v2318 = vunpack.c.l.b16 %v2222
    %v2319 = vunpack.c.l.b16 %v2223
    %v2320 = vunpack.c.l.b16 %v2224
    %v2321 = vunpack.c.l.b16 %v2225
    %v2322 = vunpack.c.l.b16 %v2226
    %v2323 = vunpack.c.l.b16 %v2227
    %v2324 = vunpack.c.l.b16 %v2228
    %v2325 = vunpack.c.l.b16 %v2229
    %v2326 = vpack.c.b16 %v2279, %v2278
    %v2327 = vpack.c.b16 %v2281, %v2280
    %v2328 = vpack.c.b16 %v2283, %v2282
    %v2329 = vpack.c.b16 %v2285, %v2284
    %v2330 = vpack.c.b16 %v2287, %v2286
    %v2331 = vpack.c.b16 %v2289, %v2288
    %v2332 = vpack.c.b16 %v2291, %v2290
    %v2333 = vpack.c.b16 %v2293, %v2292
    %v2334 = vpack.c.b16 %v2295, %v2294
    %v2335 = vpack.c.b16 %v2297, %v2296
    %v2336 = vpack.c.b16 %v2299, %v2298
    %v2337 = vpack.c.b16 %v2301, %v2300
    %v2338 = vpack.c.b16 %v2303, %v2302
    %v2339 = vpack.c.b16 %v2305, %v2304
    %v2340 = vpack.c.b16 %v2307, %v2306
    %v2341 = vpack.c.b16 %v2309, %v2308
    %v2342 = vpack.c.b16 %v2311, %v2310
    %v2343 = vpack.c.b16 %v2313, %v2312
    %v2344 = vpack.c.b16 %v2315, %v2314
    %v2345 = vpack.c.b16 %v2317, %v2316
    %v2346 = vpack.c.b16 %v2319, %v2318
    %v2347 = vpack.c.b16 %v2321, %v2320
    %v2348 = vpack.c.b16 %v2323, %v2322
    %v2349 = vpack.c.b16 %v2325, %v2324
    %2374 = vmatpush.bf16.msra.mxu0 %v2333
    %2375 = vmatpush.bf16.msra.mxu0 %v2332
    %2376 = vmatpush.bf16.msra.mxu0 %v2331
    %2377 = vmatpush.bf16.msra.mxu0 %v2330
    %2378 = vmatpush.bf16.msra.mxu0 %v2329
    %2379 = vmatpush.bf16.msra.mxu0 %v2328
    %2380 = vmatpush.bf16.msra.mxu0 %v2327
    %2381 = vmatpush.bf16.msra.mxu0 %v2326
    %2382 = vmatmul.bf16.gmra.mxu0 %v2070
    %v2383 = vpop.f32.mrf.mxu0
    %v2384 = vadd.f32 0.0, %v2383
    %v2385 = vpop.f32.mrf.mxu0
    %v2386 = vadd.f32 0.0, %v2385
    %2387 = vmatmul.bf16.gmra.mxu0 %v2071
    %v2388 = vpop.f32.mrf.mxu0
    %v2389 = vadd.f32 0.0, %v2388
    %v2390 = vpop.f32.mrf.mxu0
    %v2391 = vadd.f32 0.0, %v2390
    %2392 = vmatmul.bf16.gmra.mxu0 %v2072
    %v2393 = vpop.f32.mrf.mxu0
    %v2394 = vadd.f32 0.0, %v2393
    %v2395 = vpop.f32.mrf.mxu0
    %v2396 = vadd.f32 0.0, %v2395
    %2397 = vmatmul.bf16.gmra.mxu0 %v2073
    %v2398 = vpop.f32.mrf.mxu0
    %v2399 = vadd.f32 0.0, %v2398
    %v2400 = vpop.f32.mrf.mxu0
    %v2401 = vadd.f32 0.0, %v2400
    %2402 = vmatmul.bf16.gmra.mxu0 %v2074
    %v2403 = vpop.f32.mrf.mxu0
    %v2404 = vadd.f32 0.0, %v2403
    %v2405 = vpop.f32.mrf.mxu0
    %v2406 = vadd.f32 0.0, %v2405
    %2407 = vmatmul.bf16.gmra.mxu0 %v2075
    %v2408 = vpop.f32.mrf.mxu0
    %v2409 = vadd.f32 0.0, %v2408
    %v2410 = vpop.f32.mrf.mxu0
    %v2411 = vadd.f32 0.0, %v2410
    %2412 = vmatmul.bf16.gmra.mxu0 %v2076
    %v2413 = vpop.f32.mrf.mxu0
    %v2414 = vadd.f32 0.0, %v2413
    %v2415 = vpop.f32.mrf.mxu0
    %v2416 = vadd.f32 0.0, %v2415
    %2417 = vmatmul.bf16.gmra.mxu0 %v2077
    %v2418 = vpop.f32.mrf.mxu0
    %v2419 = vadd.f32 0.0, %v2418
    %v2420 = vpop.f32.mrf.mxu0
    %v2421 = vadd.f32 0.0, %v2420
    %2422 = vdwg.mxu0
    %2423 = vmatpush.bf16.msra.mxu0 %v2341
    %2424 = vmatpush.bf16.msra.mxu0 %v2340
    %2425 = vmatpush.bf16.msra.mxu0 %v2339
    %2426 = vmatpush.bf16.msra.mxu0 %v2338
    %2427 = vmatpush.bf16.msra.mxu0 %v2337
    %2428 = vmatpush.bf16.msra.mxu0 %v2336
    %2429 = vmatpush.bf16.msra.mxu0 %v2335
    %2430 = vmatpush.bf16.msra.mxu0 %v2334
    %2431 = vmatmul.bf16.gmra.mxu0 %v2118
    %v2432 = vpop.f32.mrf.mxu0
    %v2433 = vadd.f32 %v2384, %v2432
    %v2434 = vpop.f32.mrf.mxu0
    %v2435 = vadd.f32 %v2386, %v2434
    %2436 = vmatmul.bf16.gmra.mxu0 %v2119
    %v2437 = vpop.f32.mrf.mxu0
    %v2438 = vadd.f32 %v2389, %v2437
    %v2439 = vpop.f32.mrf.mxu0
    %v2440 = vadd.f32 %v2391, %v2439
    %2441 = vmatmul.bf16.gmra.mxu0 %v2120
    %v2442 = vpop.f32.mrf.mxu0
    %v2443 = vadd.f32 %v2394, %v2442
    %v2444 = vpop.f32.mrf.mxu0
    %v2445 = vadd.f32 %v2396, %v2444
    %2446 = vmatmul.bf16.gmra.mxu0 %v2121
    %v2447 = vpop.f32.mrf.mxu0
    %v2448 = vadd.f32 %v2399, %v2447
    %v2449 = vpop.f32.mrf.mxu0
    %v2450 = vadd.f32 %v2401, %v2449
    %2451 = vmatmul.bf16.gmra.mxu0 %v2122
    %v2452 = vpop.f32.mrf.mxu0
    %v2453 = vadd.f32 %v2404, %v2452
    %v2454 = vpop.f32.mrf.mxu0
    %v2455 = vadd.f32 %v2406, %v2454
    %2456 = vmatmul.bf16.gmra.mxu0 %v2123
    %v2457 = vpop.f32.mrf.mxu0
    %v2458 = vadd.f32 %v2409, %v2457
    %v2459 = vpop.f32.mrf.mxu0
    %v2460 = vadd.f32 %v2411, %v2459
    %2461 = vmatmul.bf16.gmra.mxu0 %v2124
    %v2462 = vpop.f32.mrf.mxu0
    %v2463 = vadd.f32 %v2414, %v2462
    %v2464 = vpop.f32.mrf.mxu0
    %v2465 = vadd.f32 %v2416, %v2464
    %2466 = vmatmul.bf16.gmra.mxu0 %v2125
    %v2467 = vpop.f32.mrf.mxu0
    %v2468 = vadd.f32 %v2419, %v2467
    %v2469 = vpop.f32.mrf.mxu0
    %v2470 = vadd.f32 %v2421, %v2469
    %2471 = vdwg.mxu0
    %2472 = vmatpush.bf16.msra.mxu0 %v2349
    %2473 = vmatpush.bf16.msra.mxu0 %v2348
    %2474 = vmatpush.bf16.msra.mxu0 %v2347
    %2475 = vmatpush.bf16.msra.mxu0 %v2346
    %2476 = vmatpush.bf16.msra.mxu0 %v2345
    %2477 = vmatpush.bf16.msra.mxu0 %v2344
    %2478 = vmatpush.bf16.msra.mxu0 %v2343
    %2479 = vmatpush.bf16.msra.mxu0 %v2342
    %2480 = vmatmul.bf16.gmra.mxu0 %v2166
    %v2481 = vpop.f32.mrf.mxu0
    %v2482 = vadd.f32 %v2433, %v2481
    %v2483 = vpop.f32.mrf.mxu0
    %v2484 = vadd.f32 %v2435, %v2483
    %2485 = vmatmul.bf16.gmra.mxu0 %v2167
    %v2486 = vpop.f32.mrf.mxu0
    %v2487 = vadd.f32 %v2438, %v2486
    %v2488 = vpop.f32.mrf.mxu0
    %v2489 = vadd.f32 %v2440, %v2488
    %2490 = vmatmul.bf16.gmra.mxu0 %v2168
    %v2491 = vpop.f32.mrf.mxu0
    %v2492 = vadd.f32 %v2443, %v2491
    %v2493 = vpop.f32.mrf.mxu0
    %v2494 = vadd.f32 %v2445, %v2493
    %2495 = vmatmul.bf16.gmra.mxu0 %v2169
    %v2496 = vpop.f32.mrf.mxu0
    %v2497 = vadd.f32 %v2448, %v2496
    %v2498 = vpop.f32.mrf.mxu0
    %v2499 = vadd.f32 %v2450, %v2498
    %2500 = vmatmul.bf16.gmra.mxu0 %v2170
    %v2501 = vpop.f32.mrf.mxu0
    %v2502 = vadd.f32 %v2453, %v2501
    %v2503 = vpop.f32.mrf.mxu0
    %v2504 = vadd.f32 %v2455, %v2503
    %2505 = vmatmul.bf16.gmra.mxu0 %v2171
    %v2506 = vpop.f32.mrf.mxu0
    %v2507 = vadd.f32 %v2458, %v2506
    %v2508 = vpop.f32.mrf.mxu0
    %v2509 = vadd.f32 %v2460, %v2508
    %2510 = vmatmul.bf16.gmra.mxu0 %v2172
    %v2511 = vpop.f32.mrf.mxu0
    %v2512 = vadd.f32 %v2463, %v2511
    %v2513 = vpop.f32.mrf.mxu0
    %v2514 = vadd.f32 %v2465, %v2513
    %2515 = vmatmul.bf16.gmra.mxu0 %v2173
    %v2516 = vpop.f32.mrf.mxu0
    %v2517 = vadd.f32 %v2468, %v2516
    %v2518 = vpop.f32.mrf.mxu0
    %v2519 = vadd.f32 %v2470, %v2518
    %2520 = vdwg.mxu0
    %v2521 = vld [vmem:[%s8] sm:$0x1]
    %v2523 = vperm.slane %v2521, 0
    %v2525 = vadd.f32 %v2482, %v2523
    %v2526 = vadd.f32 %v2484, %v2523
    %v2527 = vadd.f32 %v2487, %v2523
    %v2528 = vadd.f32 %v2489, %v2523
    %v2529 = vadd.f32 %v2492, %v2523
    %v2530 = vadd.f32 %v2494, %v2523
    %v2531 = vadd.f32 %v2497, %v2523
    %v2532 = vadd.f32 %v2499, %v2523
    %v2533 = vadd.f32 %v2502, %v2523
    %v2534 = vadd.f32 %v2504, %v2523
    %v2535 = vadd.f32 %v2507, %v2523
    %v2536 = vadd.f32 %v2509, %v2523
    %v2537 = vadd.f32 %v2512, %v2523
    %v2538 = vadd.f32 %v2514, %v2523
    %v2539 = vadd.f32 %v2517, %v2523
    %v2540 = vadd.f32 %v2519, %v2523
    %v2541 = vmax.f32 %v2525, 0.0
    %v2542 = vmax.f32 %v2526, 0.0
    %v2543 = vmax.f32 %v2527, 0.0
    %v2544 = vmax.f32 %v2528, 0.0
    %v2545 = vmax.f32 %v2529, 0.0
    %v2546 = vmax.f32 %v2530, 0.0
    %v2547 = vmax.f32 %v2531, 0.0
    %v2548 = vmax.f32 %v2532, 0.0
    %v2549 = vmax.f32 %v2533, 0.0
    %v2550 = vmax.f32 %v2534, 0.0
    %v2551 = vmax.f32 %v2535, 0.0
    %v2552 = vmax.f32 %v2536, 0.0
    %v2553 = vmax.f32 %v2537, 0.0
    %v2554 = vmax.f32 %v2538, 0.0
    %v2555 = vmax.f32 %v2539, 0.0
    %v2556 = vmax.f32 %v2540, 0.0
    %v2557 = vmax.f32 %v2541, %v2545
    %v2558 = vmax.f32 %v2543, %v2547
    %v2559 = vmax.f32 %v2557, %v2549
    %v2560 = vmax.f32 %v2558, %v2551
    %v2561 = vmax.f32 %v2559, %v2553
    %v2562 = vmax.f32 %v2560, %v2555
    %v2563 = vmax.f32 %v2561, %v2562
    %v2564 = vmax.f32 %v2542, %v2546
    %v2565 = vmax.f32 %v2544, %v2548
    %v2566 = vmax.f32 %v2564, %v2550
    %v2567 = vmax.f32 %v2565, %v2552
    %v2568 = vmax.f32 %v2566, %v2554
    %v2569 = vmax.f32 %v2567, %v2556
    %v2570 = vmax.f32 %v2568, %v2569
    %2571 = vst [vmem:[#allocation12] sm:$0xff] %v724
    %2572 = vst [vmem:[#allocation12 + $0x8] sm:$0xff] %v1337
    %2573 = vst [vmem:[#allocation12 + $0x10] sm:$0xff] %v1950
    %2574 = vst [vmem:[#allocation12 + $0x18] sm:$0xff] %v2563
    %2575 = vst [vmem:[#allocation12 + $0x20] sm:$0xff] %v731
    %2576 = vst [vmem:[#allocation12 + $0x28] sm:$0xff] %v1344
    %2577 = vst [vmem:[#allocation12 + $0x30] sm:$0xff] %v1957
    %2578 = vst [vmem:[#allocation12 + $0x38] sm:$0xff] %v2570
    // Predicated region
    $region58: #{tpu_custom_call.1} parent=1 // pred_check
      _
    $region59: #{tpu_custom_call.1} parent=1 // pred_check_branch
      %2580 = sbr.rel (0) target = $region61
    $region60: #{tpu_custom_call.1} parent=1 // pred_region
      %2582 = vsyncadd [#allocation5], 0
      %s2583 = sshll.u32 [#allocation12], 4
      %s2584 = int_to_ptr.vmem [resolvable:$true] %s2583
      %s2585 = sshll.u32 %s9, 4
      %s2586 = int_to_ptr.hbm [resolvable:$true] %s2585
      %2591 = dma.vmem_to_hbm [thread:$0]  %s2584, 1024, %s2586, [#allocation5], 512, 512, 32
    $region61: #{tpu_custom_call.1} parent=1 // pred_fallthru
      _
    // Predicated region
    $region62: #{tpu_custom_call.1} parent=1 // pred_check
      _
    $region63: #{tpu_custom_call.1} parent=1 // pred_check_branch
      %2593 = sbr.rel (0) target = $region65
    $region64: #{tpu_custom_call.1} parent=1 // pred_region
      %2595 = dma.done [#allocation5], 1024
    $region65: #{tpu_custom_call.1} parent=1 // pred_fallthru
      _
    %2596 = vsyncpa [#allocation4], 1
    %2597 = vsyncpa [#allocation7], 1
    %2598 = vsyncpa [#allocation10], 1
    %2599 = vsyncpa [#allocation5], 1

</llo_original>
